<compile_context>
chip_gen: v6e
topology: v6e:2x2x1
jax: 0.10.0
libtpu: 0.0.40
codegen_flags: <defaults>
</compile_context>

<pallas_src>
import functools
import math

import jax
import jax.numpy as jnp
import numpy as np
from jax import lax
from jax.experimental import pallas as pl
from jax.experimental.pallas import tpu as pltpu


def _mha_kernel(bias_ref, q_ref, k_ref, v_ref,
                wq_ref, bq_ref, wk_ref, bk_ref, wv_ref, bv_ref,
                wo_ref, bo_ref,
                out_ref,
                k_scr, v_scr, ctx_scr,
                *, heads, d_k, scale):
    qt = pl.program_id(1)

    # --- Per-batch K / V projections (full D), cached in VMEM scratch -------
    @pl.when(qt == 0)
    def _():
        k_scr[...] = (jnp.dot(k_ref[0], wk_ref[...],
                              preferred_element_type=jnp.float32)
                      + bk_ref[...]).astype(jnp.bfloat16)          # (L, D)
        v_scr[...] = (jnp.dot(v_ref[0], wv_ref[...],
                              preferred_element_type=jnp.float32)
                      + bv_ref[...]).astype(jnp.bfloat16)          # (L, D)

    # --- Per-tile Q projection; 1/sqrt(d_k) folded in once -------------------
    qf = ((jnp.dot(q_ref[0], wq_ref[...],
                   preferred_element_type=jnp.float32)
           + bq_ref[...]) * scale).astype(jnp.bfloat16)            # (tq, D)

    k_all = k_scr[...]                                             # (L, D) bf16
    v_all = v_scr[...]                                             # (L, D) bf16

    tq = qf.shape[0]
    L = k_all.shape[0]

    # Mask bias broadcast hoisted out of the head loop (JAX does not CSE it).
    bias_b = jnp.broadcast_to(bias_ref[0], (tq, L))                # (tq, L) f32

    # --- Attention per head (static unroll, static column slices) ------------
    for h in range(heads):
        lo = h * d_k
        qh = qf[:, lo:lo + d_k]                                    # (tq, d_k)
        kh = k_all[:, lo:lo + d_k]                                 # (L,  d_k)
        vh = v_all[:, lo:lo + d_k]                                 # (L,  d_k)

        # scores = (qh * scale) @ kh^T + mask_bias   -> (tq, L), f32 accum.
        s = lax.dot_general(qh, kh, (((1,), (1,)), ((), ())),
                            preferred_element_type=jnp.float32)
        s = s + bias_b

        # Numerically-stable softmax with deferred normalization: scale the
        # (tq, d_k) context instead of the (tq, L) probabilities.
        s = s - jnp.max(s, axis=-1, keepdims=True)
        p = jnp.exp(s)
        denom = jnp.sum(p, axis=-1, keepdims=True)                 # (tq, 1)

        # TODO(synk): dropout on attention weights omitted (eval mode).

        ctx_h = jnp.dot(p.astype(jnp.bfloat16), vh,
                        preferred_element_type=jnp.float32)        # (tq, d_k)
        ctx_h = ctx_h * pl.reciprocal(denom, approx=True)
        ctx_scr[:, lo:lo + d_k] = ctx_h.astype(jnp.bfloat16)

    # --- Single full-D output projection + single lane-dense store -----------
    out = jnp.dot(ctx_scr[...], wo_ref[...],
                  preferred_element_type=jnp.float32) + bo_ref[...]  # (tq, D)
    out_ref[0] = out.astype(out_ref.dtype)


def _vmem_capacity_bytes():
    """Per-core VMEM capacity; conservative (v7x-sized) fallback."""
    try:
        cap = getattr(pltpu.get_tpu_info(), "vmem_capacity_bytes", None)
        if cap:
            return int(cap)
    except Exception:
        pass
    return 64 * 1024 * 1024


def _pick_q_tile(L, budget):
    """Largest multiple-of-8 divisor of L that is <= budget (else full L)."""
    if L <= budget:
        return L
    best = None
    for t in range(8, budget + 1, 8):
        if L % t == 0:
            best = t
    return best if best is not None else L


def multi_headed_attention(query, key, value, mask, params, heads, q_tile=None):
    """query/key/value: (B, L, D); mask: (B, 1, 1, L) bool (True = attend)."""
    B, L, D = query.shape
    assert D % heads == 0
    d_k = D // heads
    scale = 1.0 / math.sqrt(d_k)

    # Per-generation budgets (v7x: 64 MiB physical VMEM; v5e/v6e: 128 MiB).
    vmem_cap = _vmem_capacity_bytes()
    vmem_limit = min((vmem_cap * 4) // 5, 112 * 1024 * 1024)
    q_budget = 512 if vmem_cap >= 96 * 1024 * 1024 else 256

    if q_tile is None:
        q_tile = _pick_q_tile(L, q_budget)
    assert L % q_tile == 0
    num_qt = L // q_tile

    # bf16 activations at the kernel boundary (halves activation HBM traffic;
    # they would be cast to bf16 for the MXU in-kernel anyway).
    q_bf = query.astype(jnp.bfloat16)
    k_bf = key.astype(jnp.bfloat16)
    v_bf = value.astype(jnp.bfloat16)

    # Weights: PyTorch nn.Linear is y = x @ W^T + b.  Pass full (D, D) W^T as
    # bf16 (in real use this relayout/cast is done once at parameter load).
    wq = jnp.asarray(params["wq"].T, jnp.bfloat16)                 # (D, D)
    wk = jnp.asarray(params["wk"].T, jnp.bfloat16)
    wv = jnp.asarray(params["wv"].T, jnp.bfloat16)
    wo = jnp.asarray(params["wo"].T, jnp.bfloat16)
    bq = params["bq"].reshape(1, D).astype(jnp.float32)
    bk = params["bk"].reshape(1, D).astype(jnp.float32)
    bv = params["bv"].reshape(1, D).astype(jnp.float32)
    bo = params["bo"].reshape(1, D).astype(jnp.float32)

    # Additive mask bias: 0 where attended, -1e9 where masked.
    mask_bias = jnp.where(mask, 0.0, -1000000000.0).astype(jnp.float32)
    mask_bias = mask_bias.reshape(B, 1, L)                         # (B, 1, L)

    kernel = functools.partial(_mha_kernel, heads=heads, d_k=d_k, scale=scale)

    bmap = lambda b, qt: (b, 0, 0)       # per-batch blocks (full L)
    qmap = lambda b, qt: (b, qt, 0)      # per-(batch, query-tile) blocks
    wmap = lambda b, qt: (0, 0)          # shared weight / bias blocks

    # Block index is constant along the q-tile axis for K/V / weights / biases:
    # single-buffer them so they are copied once and not double-buffered.
    single = pl.Buffered(1)

    out = pl.pallas_call(
        kernel,
        out_shape=jax.ShapeDtypeStruct((B, L, D), jnp.float32),
        grid_spec=pltpu.PrefetchScalarGridSpec(
            num_scalar_prefetch=0,
            grid=(B, num_qt),
            in_specs=[
                pl.BlockSpec((1, 1, L), bmap),                           # mask bias
                pl.BlockSpec((1, q_tile, D), qmap),                      # query (bf16)
                pl.BlockSpec((1, L, D), bmap, pipeline_mode=single),     # key (bf16)
                pl.BlockSpec((1, L, D), bmap, pipeline_mode=single),     # value (bf16)
                pl.BlockSpec((D, D), wmap, pipeline_mode=single),        # Wq^T
                pl.BlockSpec((1, D), wmap, pipeline_mode=single),        # bq
                pl.BlockSpec((D, D), wmap, pipeline_mode=single),        # Wk^T
                pl.BlockSpec((1, D), wmap, pipeline_mode=single),        # bk
                pl.BlockSpec((D, D), wmap, pipeline_mode=single),        # Wv^T
                pl.BlockSpec((1, D), wmap, pipeline_mode=single),        # bv
                pl.BlockSpec((D, D), wmap, pipeline_mode=single),        # Wo^T
                pl.BlockSpec((1, D), wmap, pipeline_mode=single),        # bo
            ],
            out_specs=pl.BlockSpec((1, q_tile, D), qmap),
            scratch_shapes=[
                pltpu.VMEM((L, D), jnp.bfloat16),       # K projection cache
                pltpu.VMEM((L, D), jnp.bfloat16),       # V projection cache
                pltpu.VMEM((q_tile, D), jnp.bfloat16),  # concatenated head contexts
            ],
        ),
        compiler_params=pltpu.CompilerParams(
            dimension_semantics=("parallel", "arbitrary"),
            vmem_limit_bytes=int(vmem_limit),
        ),
    )(mask_bias, q_bf, k_bf, v_bf, wq, bq, wk, bk, wv, bv, wo, bo)
    return out


def _reference(query, key, value, mask, params, heads):
    """Pure-JAX f32 reference of the PyTorch forward (dropout in eval mode)."""
    B, L, D = query.shape
    d_k = D // heads

    def lin(x, w, b):
        return x @ w.T + b

    q = lin(query, params["wq"], params["bq"]).reshape(B, L, heads, d_k).transpose(0, 2, 1, 3)
    k = lin(key, params["wk"], params["bk"]).reshape(B, L, heads, d_k).transpose(0, 2, 1, 3)
    v = lin(value, params["wv"], params["bv"]).reshape(B, L, heads, d_k).transpose(0, 2, 1, 3)
    scores = jnp.einsum("bhqd,bhkd->bhqk", q, k) / math.sqrt(d_k)
    scores = jnp.where(mask, scores, -1000000000.0)
    weights = jax.nn.softmax(scores, axis=-1)
    ctx = jnp.einsum("bhqk,bhkd->bhqd", weights, v)
    ctx = ctx.transpose(0, 2, 1, 3).reshape(B, L, D)
    return lin(ctx, params["wo"], params["bo"])


if __name__ == "__main__":
    B, L, D, H = 2, 8, 32, 4

    key0 = jax.random.PRNGKey(0)
    ks = jax.random.split(key0, 16)

    wscale = 1.0 / math.sqrt(D)
    params = {
        "wq": jax.random.normal(ks[0], (D, D), jnp.float32) * wscale,
        "bq": jax.random.normal(ks[1], (D,), jnp.float32) * 0.01,
        "wk": jax.random.normal(ks[2], (D, D), jnp.float32) * wscale,
        "bk": jax.random.normal(ks[3], (D,), jnp.float32) * 0.01,
        "wv": jax.random.normal(ks[4], (D, D), jnp.float32) * wscale,
        "bv": jax.random.normal(ks[5], (D,), jnp.float32) * 0.01,
        "wo": jax.random.normal(ks[6], (D, D), jnp.float32) * wscale,
        "bo": jax.random.normal(ks[7], (D,), jnp.float32) * 0.01,
    }

    query = jax.random.normal(ks[8], (B, L, D), jnp.float32)
    key_ = jax.random.normal(ks[9], (B, L, D), jnp.float32)
    value = jax.random.normal(ks[10], (B, L, D), jnp.float32)
    mask = jax.random.bernoulli(ks[11], p=0.8, shape=(B, 1, 1, L))

    out = multi_headed_attention(query, key_, value, mask, params, H)
    out = jax.block_until_ready(out)

    ref = _reference(query, key_, value, mask, params, H)
    # Tolerance accounts for bf16 MXU operands (f32 accumulation) + approx
    # reciprocal in the kernel vs. the pure-f32 reference.
    np.testing.assert_allclose(np.asarray(out), np.asarray(ref), rtol=5e-2, atol=5e-2)

    print("KERNEL_OK")
</pallas_src>

<mosaic_0001>
module attributes {stable_mosaic.version = 11 : i64} {
  func.func @_mha_kernel(%arg0: i32, %arg1: i32, %arg2: memref<1x1x8xf32, #tpu.memory_space<vmem>>, %arg3: memref<1x8x32xbf16, #tpu.memory_space<vmem>>, %arg4: memref<1x8x32xbf16, #tpu.memory_space<vmem>>, %arg5: memref<1x8x32xbf16, #tpu.memory_space<vmem>>, %arg6: memref<32x32xbf16, #tpu.memory_space<vmem>>, %arg7: memref<1x32xf32, #tpu.memory_space<vmem>>, %arg8: memref<32x32xbf16, #tpu.memory_space<vmem>>, %arg9: memref<1x32xf32, #tpu.memory_space<vmem>>, %arg10: memref<32x32xbf16, #tpu.memory_space<vmem>>, %arg11: memref<1x32xf32, #tpu.memory_space<vmem>>, %arg12: memref<32x32xbf16, #tpu.memory_space<vmem>>, %arg13: memref<1x32xf32, #tpu.memory_space<vmem>>, %arg14: memref<1x8x32xf32, #tpu.memory_space<vmem>>, %arg15: memref<8x32xbf16, #tpu.memory_space<vmem>>, %arg16: memref<8x32xbf16, #tpu.memory_space<vmem>>, %arg17: memref<8x32xbf16, #tpu.memory_space<vmem>>) attributes {dimension_semantics = [#tpu.dimension_semantics<parallel>, #tpu.dimension_semantics<arbitrary>], iteration_bounds = array<i64: 2, 1>, scalar_prefetch = 0 : i64, scratch_operands = 3 : i64, tpu.core_type = #tpu.core_type<tc>, window_params = [{transform_indices = @transform_0, window_bounds = array<i64: 1, 1, 8>}, {transform_indices = @transform_1, window_bounds = array<i64: 1, 8, 32>}, {pipeline_mode = #tpu.pipeline_mode<synchronous>, transform_indices = @transform_2, window_bounds = array<i64: 1, 8, 32>}, {pipeline_mode = #tpu.pipeline_mode<synchronous>, transform_indices = @transform_3, window_bounds = array<i64: 1, 8, 32>}, {pipeline_mode = #tpu.pipeline_mode<synchronous>, transform_indices = @transform_4, window_bounds = array<i64: 32, 32>}, {pipeline_mode = #tpu.pipeline_mode<synchronous>, transform_indices = @transform_5, window_bounds = array<i64: 1, 32>}, {pipeline_mode = #tpu.pipeline_mode<synchronous>, transform_indices = @transform_6, window_bounds = array<i64: 32, 32>}, {pipeline_mode = #tpu.pipeline_mode<synchronous>, transform_indices = @transform_7, window_bounds = array<i64: 1, 32>}, {pipeline_mode = #tpu.pipeline_mode<synchronous>, transform_indices = @transform_8, window_bounds = array<i64: 32, 32>}, {pipeline_mode = #tpu.pipeline_mode<synchronous>, transform_indices = @transform_9, window_bounds = array<i64: 1, 32>}, {pipeline_mode = #tpu.pipeline_mode<synchronous>, transform_indices = @transform_10, window_bounds = array<i64: 32, 32>}, {pipeline_mode = #tpu.pipeline_mode<synchronous>, transform_indices = @transform_11, window_bounds = array<i64: 1, 32>}, {transform_indices = @transform_12, window_bounds = array<i64: 1, 8, 32>}]} {
    %c0_i32 = arith.constant 0 : i32
    %0 = arith.cmpi eq, %arg1, %c0_i32 : i32
    %1 = arith.extui %0 : i1 to i32
    %c0_i32_0 = arith.constant 0 : i32
    %2 = arith.cmpi ne, %1, %c0_i32_0 : i32
    scf.if %2 {
      %c0_46 = arith.constant 0 : index
      %c0_47 = arith.constant 0 : index
      %c0_48 = arith.constant 0 : index
      %104 = vector.load %arg4[%c0_46, %c0_47, %c0_48] : memref<1x8x32xbf16, #tpu.memory_space<vmem>>, vector<1x8x32xbf16>
      %105 = vector.shape_cast %104 : vector<1x8x32xbf16> to vector<8x32xbf16>
      %c0_49 = arith.constant 0 : index
      %c0_50 = arith.constant 0 : index
      %106 = vector.load %arg8[%c0_49, %c0_50] : memref<32x32xbf16, #tpu.memory_space<vmem>>, vector<32x32xbf16>
      %cst_51 = arith.constant dense<0.000000e+00> : vector<8x32xf32>
      %107 = tpu.matmul %105, %106, %cst_51 {dimension_numbers = #tpu.dot_dimension_numbers<[1], [0], [0], [1], [0, 0, 1, 1], [], []>} : vector<8x32xbf16>, vector<32x32xbf16>, vector<8x32xf32> -> vector<8x32xf32>
      %c0_52 = arith.constant 0 : index
      %c0_53 = arith.constant 0 : index
      %108 = vector.load %arg9[%c0_52, %c0_53] : memref<1x32xf32, #tpu.memory_space<vmem>>, vector<1x32xf32>
      %109 = vector.broadcast %108 : vector<1x32xf32> to vector<8x32xf32>
      %110 = arith.addf %107, %109 : vector<8x32xf32>
      %111 = arith.truncf %110 : vector<8x32xf32> to vector<8x32xbf16>
      %c0_54 = arith.constant 0 : index
      %c0_55 = arith.constant 0 : index
      %112 = vector.load %arg15[%c0_54, %c0_55] : memref<8x32xbf16, #tpu.memory_space<vmem>>, vector<8x32xbf16>
      tpu.vector_store %arg15[%c0_54, %c0_55], %111 {strides = array<i32>} : memref<8x32xbf16, #tpu.memory_space<vmem>>, vector<8x32xbf16>,
      %c0_56 = arith.constant 0 : index
      %c0_57 = arith.constant 0 : index
      %c0_58 = arith.constant 0 : index
      %113 = vector.load %arg5[%c0_56, %c0_57, %c0_58] : memref<1x8x32xbf16, #tpu.memory_space<vmem>>, vector<1x8x32xbf16>
      %114 = vector.shape_cast %113 : vector<1x8x32xbf16> to vector<8x32xbf16>
      %c0_59 = arith.constant 0 : index
      %c0_60 = arith.constant 0 : index
      %115 = vector.load %arg10[%c0_59, %c0_60] : memref<32x32xbf16, #tpu.memory_space<vmem>>, vector<32x32xbf16>
      %cst_61 = arith.constant dense<0.000000e+00> : vector<8x32xf32>
      %116 = tpu.matmul %114, %115, %cst_61 {dimension_numbers = #tpu.dot_dimension_numbers<[1], [0], [0], [1], [0, 0, 1, 1], [], []>} : vector<8x32xbf16>, vector<32x32xbf16>, vector<8x32xf32> -> vector<8x32xf32>
      %c0_62 = arith.constant 0 : index
      %c0_63 = arith.constant 0 : index
      %117 = vector.load %arg11[%c0_62, %c0_63] : memref<1x32xf32, #tpu.memory_space<vmem>>, vector<1x32xf32>
      %118 = vector.broadcast %117 : vector<1x32xf32> to vector<8x32xf32>
      %119 = arith.addf %116, %118 : vector<8x32xf32>
      %120 = arith.truncf %119 : vector<8x32xf32> to vector<8x32xbf16>
      %c0_64 = arith.constant 0 : index
      %c0_65 = arith.constant 0 : index
      %121 = vector.load %arg16[%c0_64, %c0_65] : memref<8x32xbf16, #tpu.memory_space<vmem>>, vector<8x32xbf16>
      tpu.vector_store %arg16[%c0_64, %c0_65], %120 {strides = array<i32>} : memref<8x32xbf16, #tpu.memory_space<vmem>>, vector<8x32xbf16>,
    } else {
    }
    %c0 = arith.constant 0 : index
    %c0_1 = arith.constant 0 : index
    %c0_2 = arith.constant 0 : index
    %3 = vector.load %arg3[%c0, %c0_1, %c0_2] : memref<1x8x32xbf16, #tpu.memory_space<vmem>>, vector<1x8x32xbf16>
    %4 = vector.shape_cast %3 : vector<1x8x32xbf16> to vector<8x32xbf16>
    %c0_3 = arith.constant 0 : index
    %c0_4 = arith.constant 0 : index
    %5 = vector.load %arg6[%c0_3, %c0_4] : memref<32x32xbf16, #tpu.memory_space<vmem>>, vector<32x32xbf16>
    %cst = arith.constant dense<0.000000e+00> : vector<8x32xf32>
    %6 = tpu.matmul %4, %5, %cst {dimension_numbers = #tpu.dot_dimension_numbers<[1], [0], [0], [1], [0, 0, 1, 1], [], []>} : vector<8x32xbf16>, vector<32x32xbf16>, vector<8x32xf32> -> vector<8x32xf32>
    %c0_5 = arith.constant 0 : index
    %c0_6 = arith.constant 0 : index
    %7 = vector.load %arg7[%c0_5, %c0_6] : memref<1x32xf32, #tpu.memory_space<vmem>>, vector<1x32xf32>
    %8 = vector.broadcast %7 : vector<1x32xf32> to vector<8x32xf32>
    %9 = arith.addf %6, %8 : vector<8x32xf32>
    %cst_7 = arith.constant 0.353553385 : f32
    %10 = vector.broadcast %cst_7 : f32 to vector<8x32xf32>
    %11 = arith.mulf %9, %10 : vector<8x32xf32>
    %12 = arith.truncf %11 : vector<8x32xf32> to vector<8x32xbf16>
    %c0_8 = arith.constant 0 : index
    %c0_9 = arith.constant 0 : index
    %13 = vector.load %arg15[%c0_8, %c0_9] : memref<8x32xbf16, #tpu.memory_space<vmem>>, vector<8x32xbf16>
    %c0_10 = arith.constant 0 : index
    %c0_11 = arith.constant 0 : index
    %14 = vector.load %arg16[%c0_10, %c0_11] : memref<8x32xbf16, #tpu.memory_space<vmem>>, vector<8x32xbf16>
    %c0_12 = arith.constant 0 : index
    %c0_13 = arith.constant 0 : index
    %c0_14 = arith.constant 0 : index
    %15 = vector.load %arg2[%c0_12, %c0_13, %c0_14] : memref<1x1x8xf32, #tpu.memory_space<vmem>>, vector<1x1x8xf32>
    %16 = vector.shape_cast %15 : vector<1x1x8xf32> to vector<1x8xf32>
    %17 = vector.shape_cast %16 : vector<1x8xf32> to vector<1x8xf32>
    %18 = vector.broadcast %17 : vector<1x8xf32> to vector<8x8xf32>
    %19 = vector.extract_strided_slice %12 {offsets = [0, 0], sizes = [8, 8], strides = [1, 1]} : vector<8x32xbf16> to vector<8x8xbf16>
    %20 = vector.extract_strided_slice %13 {offsets = [0, 0], sizes = [8, 8], strides = [1, 1]} : vector<8x32xbf16> to vector<8x8xbf16>
    %21 = vector.extract_strided_slice %14 {offsets = [0, 0], sizes = [8, 8], strides = [1, 1]} : vector<8x32xbf16> to vector<8x8xbf16>
    %cst_15 = arith.constant dense<0.000000e+00> : vector<8x8xf32>
    %22 = tpu.matmul %19, %20, %cst_15 {dimension_numbers = #tpu.dot_dimension_numbers<[1], [1], [0], [0], [0, 0, 1, 0], [], []>} : vector<8x8xbf16>, vector<8x8xbf16>, vector<8x8xf32> -> vector<8x8xf32>
    %23 = arith.addf %22, %18 : vector<8x8xf32>
    %cst_16 = arith.constant dense<0xFF800000> : vector<8xf32>
    %24 = vector.multi_reduction <maximumf>, %23, %cst_16 [1] : vector<8x8xf32> to vector<8xf32>
    %25 = vector.shape_cast %24 : vector<8xf32> to vector<8x1xf32>
    %26 = vector.broadcast %25 : vector<8x1xf32> to vector<8x8xf32>
    %27 = arith.subf %23, %26 : vector<8x8xf32>
    %28 = math.exp %27 : vector<8x8xf32>
    %cst_17 = arith.constant dense<0.000000e+00> : vector<8xf32>
    %29 = vector.multi_reduction <add>, %28, %cst_17 [1] : vector<8x8xf32> to vector<8xf32>
    %30 = vector.shape_cast %29 : vector<8xf32> to vector<8x1xf32>
    %31 = arith.truncf %28 : vector<8x8xf32> to vector<8x8xbf16>
    %cst_18 = arith.constant dense<0.000000e+00> : vector<8x8xf32>
    %32 = tpu.matmul %31, %21, %cst_18 {dimension_numbers = #tpu.dot_dimension_numbers<[1], [0], [0], [1], [0, 0, 1, 1], [], []>} : vector<8x8xbf16>, vector<8x8xbf16>, vector<8x8xf32> -> vector<8x8xf32>
    %33 = tpu.reciprocal %30 {approx = true} : vector<8x1xf32> -> vector<8x1xf32>
    %34 = vector.broadcast %33 : vector<8x1xf32> to vector<8x8xf32>
    %35 = arith.mulf %32, %34 : vector<8x8xf32>
    %36 = arith.truncf %35 : vector<8x8xf32> to vector<8x8xbf16>
    %c0_19 = arith.constant 0 : index
    %c0_20 = arith.constant 0 : index
    %37 = vector.load %arg17[%c0_19, %c0_20] : memref<8x32xbf16, #tpu.memory_space<vmem>>, vector<8x8xbf16>
    tpu.vector_store %arg17[%c0_19, %c0_20], %36 {strides = array<i32>} : memref<8x32xbf16, #tpu.memory_space<vmem>>, vector<8x8xbf16>,
    %38 = vector.extract_strided_slice %12 {offsets = [0, 8], sizes = [8, 8], strides = [1, 1]} : vector<8x32xbf16> to vector<8x8xbf16>
    %39 = vector.extract_strided_slice %13 {offsets = [0, 8], sizes = [8, 8], strides = [1, 1]} : vector<8x32xbf16> to vector<8x8xbf16>
    %40 = vector.extract_strided_slice %14 {offsets = [0, 8], sizes = [8, 8], strides = [1, 1]} : vector<8x32xbf16> to vector<8x8xbf16>
    %cst_21 = arith.constant dense<0.000000e+00> : vector<8x8xf32>
    %41 = tpu.matmul %38, %39, %cst_21 {dimension_numbers = #tpu.dot_dimension_numbers<[1], [1], [0], [0], [0, 0, 1, 0], [], []>} : vector<8x8xbf16>, vector<8x8xbf16>, vector<8x8xf32> -> vector<8x8xf32>
    %42 = arith.addf %41, %18 : vector<8x8xf32>
    %cst_22 = arith.constant dense<0xFF800000> : vector<8xf32>
    %43 = vector.multi_reduction <maximumf>, %42, %cst_22 [1] : vector<8x8xf32> to vector<8xf32>
    %44 = vector.shape_cast %43 : vector<8xf32> to vector<8x1xf32>
    %45 = vector.broadcast %44 : vector<8x1xf32> to vector<8x8xf32>
    %46 = arith.subf %42, %45 : vector<8x8xf32>
    %47 = math.exp %46 : vector<8x8xf32>
    %cst_23 = arith.constant dense<0.000000e+00> : vector<8xf32>
    %48 = vector.multi_reduction <add>, %47, %cst_23 [1] : vector<8x8xf32> to vector<8xf32>
    %49 = vector.shape_cast %48 : vector<8xf32> to vector<8x1xf32>
    %50 = arith.truncf %47 : vector<8x8xf32> to vector<8x8xbf16>
    %cst_24 = arith.constant dense<0.000000e+00> : vector<8x8xf32>
    %51 = tpu.matmul %50, %40, %cst_24 {dimension_numbers = #tpu.dot_dimension_numbers<[1], [0], [0], [1], [0, 0, 1, 1], [], []>} : vector<8x8xbf16>, vector<8x8xbf16>, vector<8x8xf32> -> vector<8x8xf32>
    %52 = tpu.reciprocal %49 {approx = true} : vector<8x1xf32> -> vector<8x1xf32>
    %53 = vector.broadcast %52 : vector<8x1xf32> to vector<8x8xf32>
    %54 = arith.mulf %51, %53 : vector<8x8xf32>
    %55 = arith.truncf %54 : vector<8x8xf32> to vector<8x8xbf16>
    %c0_25 = arith.constant 0 : index
    %c8 = arith.constant 8 : index
    %56 = vector.load %arg17[%c0_25, %c8] : memref<8x32xbf16, #tpu.memory_space<vmem>>, vector<8x8xbf16>
    tpu.vector_store %arg17[%c0_25, %c8], %55 {strides = array<i32>} : memref<8x32xbf16, #tpu.memory_space<vmem>>, vector<8x8xbf16>,
    %57 = vector.extract_strided_slice %12 {offsets = [0, 16], sizes = [8, 8], strides = [1, 1]} : vector<8x32xbf16> to vector<8x8xbf16>
    %58 = vector.extract_strided_slice %13 {offsets = [0, 16], sizes = [8, 8], strides = [1, 1]} : vector<8x32xbf16> to vector<8x8xbf16>
    %59 = vector.extract_strided_slice %14 {offsets = [0, 16], sizes = [8, 8], strides = [1, 1]} : vector<8x32xbf16> to vector<8x8xbf16>
    %cst_26 = arith.constant dense<0.000000e+00> : vector<8x8xf32>
    %60 = tpu.matmul %57, %58, %cst_26 {dimension_numbers = #tpu.dot_dimension_numbers<[1], [1], [0], [0], [0, 0, 1, 0], [], []>} : vector<8x8xbf16>, vector<8x8xbf16>, vector<8x8xf32> -> vector<8x8xf32>
    %61 = arith.addf %60, %18 : vector<8x8xf32>
    %cst_27 = arith.constant dense<0xFF800000> : vector<8xf32>
    %62 = vector.multi_reduction <maximumf>, %61, %cst_27 [1] : vector<8x8xf32> to vector<8xf32>
    %63 = vector.shape_cast %62 : vector<8xf32> to vector<8x1xf32>
    %64 = vector.broadcast %63 : vector<8x1xf32> to vector<8x8xf32>
    %65 = arith.subf %61, %64 : vector<8x8xf32>
    %66 = math.exp %65 : vector<8x8xf32>
    %cst_28 = arith.constant dense<0.000000e+00> : vector<8xf32>
    %67 = vector.multi_reduction <add>, %66, %cst_28 [1] : vector<8x8xf32> to vector<8xf32>
    %68 = vector.shape_cast %67 : vector<8xf32> to vector<8x1xf32>
    %69 = arith.truncf %66 : vector<8x8xf32> to vector<8x8xbf16>
    %cst_29 = arith.constant dense<0.000000e+00> : vector<8x8xf32>
    %70 = tpu.matmul %69, %59, %cst_29 {dimension_numbers = #tpu.dot_dimension_numbers<[1], [0], [0], [1], [0, 0, 1, 1], [], []>} : vector<8x8xbf16>, vector<8x8xbf16>, vector<8x8xf32> -> vector<8x8xf32>
    %71 = tpu.reciprocal %68 {approx = true} : vector<8x1xf32> -> vector<8x1xf32>
    %72 = vector.broadcast %71 : vector<8x1xf32> to vector<8x8xf32>
    %73 = arith.mulf %70, %72 : vector<8x8xf32>
    %74 = arith.truncf %73 : vector<8x8xf32> to vector<8x8xbf16>
    %c0_30 = arith.constant 0 : index
    %c16 = arith.constant 16 : index
    %75 = vector.load %arg17[%c0_30, %c16] : memref<8x32xbf16, #tpu.memory_space<vmem>>, vector<8x8xbf16>
    tpu.vector_store %arg17[%c0_30, %c16], %74 {strides = array<i32>} : memref<8x32xbf16, #tpu.memory_space<vmem>>, vector<8x8xbf16>,
    %76 = vector.extract_strided_slice %12 {offsets = [0, 24], sizes = [8, 8], strides = [1, 1]} : vector<8x32xbf16> to vector<8x8xbf16>
    %77 = vector.extract_strided_slice %13 {offsets = [0, 24], sizes = [8, 8], strides = [1, 1]} : vector<8x32xbf16> to vector<8x8xbf16>
    %78 = vector.extract_strided_slice %14 {offsets = [0, 24], sizes = [8, 8], strides = [1, 1]} : vector<8x32xbf16> to vector<8x8xbf16>
    %cst_31 = arith.constant dense<0.000000e+00> : vector<8x8xf32>
    %79 = tpu.matmul %76, %77, %cst_31 {dimension_numbers = #tpu.dot_dimension_numbers<[1], [1], [0], [0], [0, 0, 1, 0], [], []>} : vector<8x8xbf16>, vector<8x8xbf16>, vector<8x8xf32> -> vector<8x8xf32>
    %80 = arith.addf %79, %18 : vector<8x8xf32>
    %cst_32 = arith.constant dense<0xFF800000> : vector<8xf32>
    %81 = vector.multi_reduction <maximumf>, %80, %cst_32 [1] : vector<8x8xf32> to vector<8xf32>
    %82 = vector.shape_cast %81 : vector<8xf32> to vector<8x1xf32>
    %83 = vector.broadcast %82 : vector<8x1xf32> to vector<8x8xf32>
    %84 = arith.subf %80, %83 : vector<8x8xf32>
    %85 = math.exp %84 : vector<8x8xf32>
    %cst_33 = arith.constant dense<0.000000e+00> : vector<8xf32>
    %86 = vector.multi_reduction <add>, %85, %cst_33 [1] : vector<8x8xf32> to vector<8xf32>
    %87 = vector.shape_cast %86 : vector<8xf32> to vector<8x1xf32>
    %88 = arith.truncf %85 : vector<8x8xf32> to vector<8x8xbf16>
    %cst_34 = arith.constant dense<0.000000e+00> : vector<8x8xf32>
    %89 = tpu.matmul %88, %78, %cst_34 {dimension_numbers = #tpu.dot_dimension_numbers<[1], [0], [0], [1], [0, 0, 1, 1], [], []>} : vector<8x8xbf16>, vector<8x8xbf16>, vector<8x8xf32> -> vector<8x8xf32>
    %90 = tpu.reciprocal %87 {approx = true} : vector<8x1xf32> -> vector<8x1xf32>
    %91 = vector.broadcast %90 : vector<8x1xf32> to vector<8x8xf32>
    %92 = arith.mulf %89, %91 : vector<8x8xf32>
    %93 = arith.truncf %92 : vector<8x8xf32> to vector<8x8xbf16>
    %c0_35 = arith.constant 0 : index
    %c24 = arith.constant 24 : index
    %94 = vector.load %arg17[%c0_35, %c24] : memref<8x32xbf16, #tpu.memory_space<vmem>>, vector<8x8xbf16>
    tpu.vector_store %arg17[%c0_35, %c24], %93 {strides = array<i32>} : memref<8x32xbf16, #tpu.memory_space<vmem>>, vector<8x8xbf16>,
    %c0_36 = arith.constant 0 : index
    %c0_37 = arith.constant 0 : index
    %95 = vector.load %arg17[%c0_36, %c0_37] : memref<8x32xbf16, #tpu.memory_space<vmem>>, vector<8x32xbf16>
    %c0_38 = arith.constant 0 : index
    %c0_39 = arith.constant 0 : index
    %96 = vector.load %arg12[%c0_38, %c0_39] : memref<32x32xbf16, #tpu.memory_space<vmem>>, vector<32x32xbf16>
    %cst_40 = arith.constant dense<0.000000e+00> : vector<8x32xf32>
    %97 = tpu.matmul %95, %96, %cst_40 {dimension_numbers = #tpu.dot_dimension_numbers<[1], [0], [0], [1], [0, 0, 1, 1], [], []>} : vector<8x32xbf16>, vector<32x32xbf16>, vector<8x32xf32> -> vector<8x32xf32>
    %c0_41 = arith.constant 0 : index
    %c0_42 = arith.constant 0 : index
    %98 = vector.load %arg13[%c0_41, %c0_42] : memref<1x32xf32, #tpu.memory_space<vmem>>, vector<1x32xf32>
    %99 = vector.broadcast %98 : vector<1x32xf32> to vector<8x32xf32>
    %100 = arith.addf %97, %99 : vector<8x32xf32>
    %c0_43 = arith.constant 0 : index
    %c0_44 = arith.constant 0 : index
    %c0_45 = arith.constant 0 : index
    %101 = vector.load %arg14[%c0_43, %c0_44, %c0_45] : memref<1x8x32xf32, #tpu.memory_space<vmem>>, vector<1x8x32xf32>
    %102 = vector.shape_cast %101 : vector<1x8x32xf32> to vector<8x32xf32>
    %103 = vector.shape_cast %100 : vector<8x32xf32> to vector<1x8x32xf32>
    tpu.vector_store %arg14[%c0_43, %c0_44, %c0_45], %103 {strides = array<i32>} : memref<1x8x32xf32, #tpu.memory_space<vmem>>, vector<1x8x32xf32>,
    return
  }
  func.func @transform_0(%arg0: i32, %arg1: i32) -> (i32, i32, i32) {
    %c0_i32 = arith.constant 0 : i32
    %c0_i32_0 = arith.constant 0 : i32
    %c0_i32_1 = arith.constant 0 : i32
    return %arg0, %c0_i32, %c0_i32_0 : i32, i32, i32
  }
  func.func @transform_1(%arg0: i32, %arg1: i32) -> (i32, i32, i32) {
    %c0_i32 = arith.constant 0 : i32
    %c0_i32_0 = arith.constant 0 : i32
    return %arg0, %arg1, %c0_i32 : i32, i32, i32
  }
  func.func @transform_2(%arg0: i32, %arg1: i32) -> (i32, i32, i32) {
    %c0_i32 = arith.constant 0 : i32
    %c0_i32_0 = arith.constant 0 : i32
    %c0_i32_1 = arith.constant 0 : i32
    return %arg0, %c0_i32, %c0_i32_0 : i32, i32, i32
  }
  func.func @transform_3(%arg0: i32, %arg1: i32) -> (i32, i32, i32) {
    %c0_i32 = arith.constant 0 : i32
    %c0_i32_0 = arith.constant 0 : i32
    %c0_i32_1 = arith.constant 0 : i32
    return %arg0, %c0_i32, %c0_i32_0 : i32, i32, i32
  }
  func.func @transform_4(%arg0: i32, %arg1: i32) -> (i32, i32) {
    %c0_i32 = arith.constant 0 : i32
    %c0_i32_0 = arith.constant 0 : i32
    %c0_i32_1 = arith.constant 0 : i32
    return %c0_i32, %c0_i32_0 : i32, i32
  }
  func.func @transform_5(%arg0: i32, %arg1: i32) -> (i32, i32) {
    %c0_i32 = arith.constant 0 : i32
    %c0_i32_0 = arith.constant 0 : i32
    %c0_i32_1 = arith.constant 0 : i32
    return %c0_i32, %c0_i32_0 : i32, i32
  }
  func.func @transform_6(%arg0: i32, %arg1: i32) -> (i32, i32) {
    %c0_i32 = arith.constant 0 : i32
    %c0_i32_0 = arith.constant 0 : i32
    %c0_i32_1 = arith.constant 0 : i32
    return %c0_i32, %c0_i32_0 : i32, i32
  }
  func.func @transform_7(%arg0: i32, %arg1: i32) -> (i32, i32) {
    %c0_i32 = arith.constant 0 : i32
    %c0_i32_0 = arith.constant 0 : i32
    %c0_i32_1 = arith.constant 0 : i32
    return %c0_i32, %c0_i32_0 : i32, i32
  }
  func.func @transform_8(%arg0: i32, %arg1: i32) -> (i32, i32) {
    %c0_i32 = arith.constant 0 : i32
    %c0_i32_0 = arith.constant 0 : i32
    %c0_i32_1 = arith.constant 0 : i32
    return %c0_i32, %c0_i32_0 : i32, i32
  }
  func.func @transform_9(%arg0: i32, %arg1: i32) -> (i32, i32) {
    %c0_i32 = arith.constant 0 : i32
    %c0_i32_0 = arith.constant 0 : i32
    %c0_i32_1 = arith.constant 0 : i32
    return %c0_i32, %c0_i32_0 : i32, i32
  }
  func.func @transform_10(%arg0: i32, %arg1: i32) -> (i32, i32) {
    %c0_i32 = arith.constant 0 : i32
    %c0_i32_0 = arith.constant 0 : i32
    %c0_i32_1 = arith.constant 0 : i32
    return %c0_i32, %c0_i32_0 : i32, i32
  }
  func.func @transform_11(%arg0: i32, %arg1: i32) -> (i32, i32) {
    %c0_i32 = arith.constant 0 : i32
    %c0_i32_0 = arith.constant 0 : i32
    %c0_i32_1 = arith.constant 0 : i32
    return %c0_i32, %c0_i32_0 : i32, i32
  }
  func.func @transform_12(%arg0: i32, %arg1: i32) -> (i32, i32, i32) {
    %c0_i32 = arith.constant 0 : i32
    %c0_i32_0 = arith.constant 0 : i32
    return %arg0, %arg1, %c0_i32 : i32, i32, i32
  }
}

</mosaic_0001>

<llo_original>
// kernel: tpu_custom_call.1
$region0: #{tpu_custom_call.1}
  #allocation0 [shape = 'u32[]', space=smem, size = 0x4, offset = 0x4, fixed_abs, tag = 'smem constant byte address 0x4 - core index']
  #allocation1 [shape = 'u32[144,128]{1,0:T(1,128)}', space=vmem, size = 0x12000, scoped, tag = 'internal scratch']
  #allocation2 [shape = 'bf16[8,32]{1,0:T(8,128)(2,1)}', space=vmem, size = 0x800, scoped, tag = 'scratch operand']
  #allocation3 [shape = 'bf16[8,32]{1,0:T(8,128)(2,1)}', space=vmem, size = 0x800, scoped, tag = 'scratch operand']
  #allocation4 [shape = 'bf16[8,32]{1,0:T(8,128)(2,1)}', space=vmem, size = 0x800, scoped, tag = 'scratch operand']
  %s0 = inlined_call_operand.hbm [shape: f32[2,1,8], index: 0, kind: input, shape index: {}]
  %s1 = inlined_call_operand.hbm [shape: bf16[2,8,32], index: 1, kind: input, shape index: {}]
  %s2 = inlined_call_operand.hbm [shape: bf16[2,8,32], index: 2, kind: input, shape index: {}]
  %s3 = inlined_call_operand.hbm [shape: bf16[2,8,32], index: 3, kind: input, shape index: {}]
  %s4 = inlined_call_operand.hbm [shape: bf16[32,32], index: 4, kind: input, shape index: {}]
  %s5 = inlined_call_operand.vmem [shape: f32[1,32], index: 5, kind: input, shape index: {}]
  %s6 = inlined_call_operand.hbm [shape: bf16[32,32], index: 6, kind: input, shape index: {}]
  %s7 = inlined_call_operand.vmem [shape: f32[1,32], index: 7, kind: input, shape index: {}]
  %s8 = inlined_call_operand.hbm [shape: bf16[32,32], index: 8, kind: input, shape index: {}]
  %s9 = inlined_call_operand.hbm [shape: f32[1,32], index: 9, kind: input, shape index: {}]
  %s10 = inlined_call_operand.vmem [shape: bf16[32,32], index: 10, kind: input, shape index: {}]
  %s11 = inlined_call_operand.vmem [shape: f32[1,32], index: 11, kind: input, shape index: {}]
  %s12 = inlined_call_operand.hbm [shape: f32[2,8,32], index: 12, kind: output, shape index: {}]
  %s13 = sld [smem:[#allocation0]]
  $region117: #{tpu_custom_call.1} parent=0
    _
  %s15 = ssub.s32 1, %s13
  %s16 = scalar_select 0, %s15, %s13
  $region1: #{tpu_custom_call.1} parent=0
    #allocation5 [shape = 'u8[1024]{0}', space=vmem, size = 0x400, scoped, tag = 'input window, operand 0']
    #allocation6 [shape = 's32[2]{0}', space=sflag, size = 0x8, scoped, tag = 'scoped memory for tpu_custom_call.1']
    #allocation7 [shape = 's32[2]{0}', space=sflag, size = 0x8, scoped, tag = 'scoped memory for tpu_custom_call.1']
    #allocation8 [shape = 'u8[4096]{0}', space=vmem, size = 0x1000, scoped, tag = 'input window, operand 1']
    #allocation9 [shape = 's32[2]{0}', space=sflag, size = 0x8, scoped, tag = 'scoped memory for tpu_custom_call.1']
    #allocation10 [shape = 'u8[2048]{0}', space=vmem, size = 0x800, scoped, tag = 'input window, operand 2, single buffered']
    #allocation11 [shape = 'u8[2048]{0}', space=vmem, size = 0x800, scoped, tag = 'input window, operand 3, single buffered']
    #allocation12 [shape = 's32[1]{0}', space=sflag, size = 0x4, scoped, tag = 'scoped memory for tpu_custom_call.1']
    #allocation13 [shape = 'u8[8192]{0}', space=vmem, size = 0x2000, scoped, tag = 'input window, operand 4, single buffered']
    #allocation14 [shape = 'u8[8192]{0}', space=vmem, size = 0x2000, scoped, tag = 'input window, operand 6, single buffered']
    #allocation15 [shape = 's32[1]{0}', space=sflag, size = 0x4, scoped, tag = 'scoped memory for tpu_custom_call.1']
    #allocation16 [shape = 'u8[8192]{0}', space=vmem, size = 0x2000, scoped, tag = 'input window, operand 8, single buffered']
    #allocation17 [shape = 'u8[512]{0}', space=vmem, size = 0x400, scoped, tag = 'input window, operand 9, single buffered']
    #allocation18 [shape = 's32[1]{0}', space=sflag, size = 0x4, scoped, tag = 'scoped memory for tpu_custom_call.1']
    #allocation19 [shape = 'u8[8192]{0}', space=vmem, size = 0x2000, scoped, tag = 'output window, operand 0']
    %17 = vsyncpa [#allocation6], 0
    %s18 = scalar_lea.sflag [#allocation6], 1
    %19 = vsyncpa %s18, 0
    %20 = vsyncpa [#allocation9], 0
    %s21 = scalar_lea.sflag [#allocation9], 1
    %22 = vsyncpa %s21, 0
    %23 = vsyncpa [#allocation12], 0
    %24 = vsyncpa [#allocation15], 0
    %25 = vsyncpa [#allocation18], 0
    %26 = vsyncpa [#allocation7], 0
    %s27 = scalar_lea.sflag [#allocation7], 1
    %28 = vsyncpa %s27, 0
    loop: start=0, step=1, limit=4
    $region2: #{tpu_custom_call.1} parent=1 // loop_pre_header
      _
    $region3: #{tpu_custom_call.1} parent=1 // loop_header
      %s30 = sphi 0, %s34
      %p31 = scmp.ge.s32.totalorder %s30, 4
      %s37 = sphi 0, %s49
      %s38 = sphi 0, %s45
      %s39 = sphi 0, %s37
      %s40 = sphi 0, %s38
      %s41 = sphi 0, %s39
      %s42 = sphi 0, %s40
      %s52 = sphi 0, %s54
      %s55 = sphi 0, %s52
      %s56 = sphi 0, %s55
      %s72 = sphi 0, %s56
      %s80 = sphi 0, %s82
      %s83 = sphi 0, %s80
      %s84 = sphi 0, %s83
      %s100 = sphi 0, %s84
      %s106 = sphi 0, %s108
      %s109 = sphi 0, %s106
      %s110 = sphi 0, %s109
      %s126 = sphi 0, %s110
      %s132 = sphi 0, %s134
      %s135 = sphi 0, %s132
      %s136 = sphi 0, %s135
      %s152 = sphi 0, %s136
      %s156 = sphi 0, %s156
      %s158 = sphi 0, %s156
      %s159 = sphi 0, %s158
      %s173 = sphi 0, %s159
      %s177 = sphi 0, %s177
      %s179 = sphi 0, %s177
      %s180 = sphi 0, %s179
      %s194 = sphi 0, %s180
      %s198 = sphi 0, %s198
      %s200 = sphi 0, %s198
      %s201 = sphi 0, %s200
      %s215 = sphi 0, %s201
      %s219 = sphi 0, %s219
      %s221 = sphi 0, %s219
      %s222 = sphi 0, %s221
      %s236 = sphi 0, %s222
      %s240 = sphi 0, %s240
      %s242 = sphi 0, %s240
      %s243 = sphi 0, %s242
      %s257 = sphi 0, %s243
      %s261 = sphi 0, %s261
      %s263 = sphi 0, %s261
      %s264 = sphi 0, %s263
      %s278 = sphi 0, %s264
      %s282 = sphi 0, %s282
      %s284 = sphi 0, %s282
      %s285 = sphi 0, %s284
      %s299 = sphi 0, %s285
      %s303 = sphi 0, %s303
      %s305 = sphi 0, %s303
      %s306 = sphi 0, %s305
      %s320 = sphi 0, %s306
      %s328 = sphi 0, %s330
      %s331 = sphi 0, %s328
      %s332 = sphi 0, %s331
      %s348 = sphi 0, %s332
    $region4: #{tpu_custom_call.1} parent=1 // loop_header_branch
      %33 = sbr.rel (%p31) target = $region8
    $region5: #{tpu_custom_call.1} parent=1 // loop_body
      %s35 = ssub.s32 %s30, 1
      %s36 = ssub.s32 %s30, 2
      %s43 = sadd.s32 1, %s38
      %p44 = scmp.ge.s32.totalorder %s43, 1
      %s45 = scalar_select %p44, 0, %s43
      %s46 = sadd.s32 1, %s37
      %s47 = scalar_select %p44, %s46, %s37
      %p48 = scmp.ge.s32.totalorder %s47, 2
      %s49 = scalar_select %p48, 0, %s47
      %s50 = ssub.s32 %s37, %s49
      %p51 = scmp.eq.s32.totalorder %s50, 0
      %s53 = sadd.s32 %s52, 1
      %s54 = scalar_select %p51, %s52, %s53
      %p57 = pneg %p51
      %p58 = scmp.eq.s32.totalorder %s30, 1
      %p59 = por %p57, %p58
      %p60 = scmp.ne.s32.totalorder %s52, %s55
      %p61 = scmp.eq.s32.totalorder %s30, 0
      %p62 = por %p60, %p61
      %p63 = scmp.ne.s32.totalorder %s52, %s55
      %p64 = scmp.eq.s32.totalorder %s35, 1
      %p65 = por %p63, %p64
      %p66 = scmp.ne.s32.totalorder %s55, %s56
      %p67 = scmp.eq.s32.totalorder %s35, 0
      %p68 = por %p66, %p67
      %p69 = scmp.ne.s32.totalorder %s55, %s56
      %p70 = scmp.eq.s32.totalorder %s36, 1
      %p71 = por %p69, %p70
      %p73 = scmp.ne.s32.totalorder %s56, %s72
      %p74 = scmp.eq.s32.totalorder %s36, 0
      %p75 = por %p73, %p74
      %s76 = ssub.s32 %s37, %s49
      %s77 = ssub.s32 %s38, %s45
      %s78 = sor.u32 %s76, %s77
      %p79 = scmp.eq.s32.totalorder %s78, 0
      %s81 = sadd.s32 %s80, 1
      %s82 = scalar_select %p79, %s80, %s81
      %p85 = pneg %p79
      %p86 = scmp.eq.s32.totalorder %s30, 1
      %p87 = por %p85, %p86
      %p88 = scmp.ne.s32.totalorder %s80, %s83
      %p89 = scmp.eq.s32.totalorder %s30, 0
      %p90 = por %p88, %p89
      %p91 = scmp.ne.s32.totalorder %s80, %s83
      %p92 = scmp.eq.s32.totalorder %s35, 1
      %p93 = por %p91, %p92
      %p94 = scmp.ne.s32.totalorder %s83, %s84
      %p95 = scmp.eq.s32.totalorder %s35, 0
      %p96 = por %p94, %p95
      %p97 = scmp.ne.s32.totalorder %s83, %s84
      %p98 = scmp.eq.s32.totalorder %s36, 1
      %p99 = por %p97, %p98
      %p101 = scmp.ne.s32.totalorder %s84, %s100
      %p102 = scmp.eq.s32.totalorder %s36, 0
      %p103 = por %p101, %p102
      %s104 = ssub.s32 %s37, %s49
      %p105 = scmp.eq.s32.totalorder %s104, 0
      %s107 = sadd.s32 %s106, 1
      %s108 = scalar_select %p105, %s106, %s107
      %p111 = pneg %p105
      %p112 = scmp.eq.s32.totalorder %s30, 1
      %p113 = por %p111, %p112
      %p114 = scmp.ne.s32.totalorder %s106, %s109
      %p115 = scmp.eq.s32.totalorder %s30, 0
      %p116 = por %p114, %p115
      %p117 = scmp.ne.s32.totalorder %s106, %s109
      %p118 = scmp.eq.s32.totalorder %s35, 1
      %p119 = por %p117, %p118
      %p120 = scmp.ne.s32.totalorder %s109, %s110
      %p121 = scmp.eq.s32.totalorder %s35, 0
      %p122 = por %p120, %p121
      %p123 = scmp.ne.s32.totalorder %s109, %s110
      %p124 = scmp.eq.s32.totalorder %s36, 1
      %p125 = por %p123, %p124
      %p127 = scmp.ne.s32.totalorder %s110, %s126
      %p128 = scmp.eq.s32.totalorder %s36, 0
      %p129 = por %p127, %p128
      %s130 = ssub.s32 %s37, %s49
      %p131 = scmp.eq.s32.totalorder %s130, 0
      %s133 = sadd.s32 %s132, 1
      %s134 = scalar_select %p131, %s132, %s133
      %p137 = pneg %p131
      %p138 = scmp.eq.s32.totalorder %s30, 1
      %p139 = por %p137, %p138
      %p140 = scmp.ne.s32.totalorder %s132, %s135
      %p141 = scmp.eq.s32.totalorder %s30, 0
      %p142 = por %p140, %p141
      %p143 = scmp.ne.s32.totalorder %s132, %s135
      %p144 = scmp.eq.s32.totalorder %s35, 1
      %p145 = por %p143, %p144
      %p146 = scmp.ne.s32.totalorder %s135, %s136
      %p147 = scmp.eq.s32.totalorder %s35, 0
      %p148 = por %p146, %p147
      %p149 = scmp.ne.s32.totalorder %s135, %s136
      %p150 = scmp.eq.s32.totalorder %s36, 1
      %p151 = por %p149, %p150
      %p153 = scmp.ne.s32.totalorder %s136, %s152
      %p154 = scmp.eq.s32.totalorder %s36, 0
      %p155 = por %p153, %p154
      %s157 = sadd.s32 %s156, 1
      %p160 = scmp.eq.s32.totalorder %s30, 1
      %p161 = scmp.ne.s32.totalorder %s156, %s158
      %p162 = scmp.eq.s32.totalorder %s30, 0
      %p163 = por %p161, %p162
      %p164 = scmp.ne.s32.totalorder %s156, %s158
      %p165 = scmp.eq.s32.totalorder %s35, 1
      %p166 = por %p164, %p165
      %p167 = scmp.ne.s32.totalorder %s158, %s159
      %p168 = scmp.eq.s32.totalorder %s35, 0
      %p169 = por %p167, %p168
      %p170 = scmp.ne.s32.totalorder %s158, %s159
      %p171 = scmp.eq.s32.totalorder %s36, 1
      %p172 = por %p170, %p171
      %p174 = scmp.ne.s32.totalorder %s159, %s173
      %p175 = scmp.eq.s32.totalorder %s36, 0
      %p176 = por %p174, %p175
      %s178 = sadd.s32 %s177, 1
      %p181 = scmp.eq.s32.totalorder %s30, 1
      %p182 = scmp.ne.s32.totalorder %s177, %s179
      %p183 = scmp.eq.s32.totalorder %s30, 0
      %p184 = por %p182, %p183
      %p185 = scmp.ne.s32.totalorder %s177, %s179
      %p186 = scmp.eq.s32.totalorder %s35, 1
      %p187 = por %p185, %p186
      %p188 = scmp.ne.s32.totalorder %s179, %s180
      %p189 = scmp.eq.s32.totalorder %s35, 0
      %p190 = por %p188, %p189
      %p191 = scmp.ne.s32.totalorder %s179, %s180
      %p192 = scmp.eq.s32.totalorder %s36, 1
      %p193 = por %p191, %p192
      %p195 = scmp.ne.s32.totalorder %s180, %s194
      %p196 = scmp.eq.s32.totalorder %s36, 0
      %p197 = por %p195, %p196
      %s199 = sadd.s32 %s198, 1
      %p202 = scmp.eq.s32.totalorder %s30, 1
      %p203 = scmp.ne.s32.totalorder %s198, %s200
      %p204 = scmp.eq.s32.totalorder %s30, 0
      %p205 = por %p203, %p204
      %p206 = scmp.ne.s32.totalorder %s198, %s200
      %p207 = scmp.eq.s32.totalorder %s35, 1
      %p208 = por %p206, %p207
      %p209 = scmp.ne.s32.totalorder %s200, %s201
      %p210 = scmp.eq.s32.totalorder %s35, 0
      %p211 = por %p209, %p210
      %p212 = scmp.ne.s32.totalorder %s200, %s201
      %p213 = scmp.eq.s32.totalorder %s36, 1
      %p214 = por %p212, %p213
      %p216 = scmp.ne.s32.totalorder %s201, %s215
      %p217 = scmp.eq.s32.totalorder %s36, 0
      %p218 = por %p216, %p217
      %s220 = sadd.s32 %s219, 1
      %p223 = scmp.eq.s32.totalorder %s30, 1
      %p224 = scmp.ne.s32.totalorder %s219, %s221
      %p225 = scmp.eq.s32.totalorder %s30, 0
      %p226 = por %p224, %p225
      %p227 = scmp.ne.s32.totalorder %s219, %s221
      %p228 = scmp.eq.s32.totalorder %s35, 1
      %p229 = por %p227, %p228
      %p230 = scmp.ne.s32.totalorder %s221, %s222
      %p231 = scmp.eq.s32.totalorder %s35, 0
      %p232 = por %p230, %p231
      %p233 = scmp.ne.s32.totalorder %s221, %s222
      %p234 = scmp.eq.s32.totalorder %s36, 1
      %p235 = por %p233, %p234
      %p237 = scmp.ne.s32.totalorder %s222, %s236
      %p238 = scmp.eq.s32.totalorder %s36, 0
      %p239 = por %p237, %p238
      %s241 = sadd.s32 %s240, 1
      %p244 = scmp.eq.s32.totalorder %s30, 1
      %p245 = scmp.ne.s32.totalorder %s240, %s242
      %p246 = scmp.eq.s32.totalorder %s30, 0
      %p247 = por %p245, %p246
      %p248 = scmp.ne.s32.totalorder %s240, %s242
      %p249 = scmp.eq.s32.totalorder %s35, 1
      %p250 = por %p248, %p249
      %p251 = scmp.ne.s32.totalorder %s242, %s243
      %p252 = scmp.eq.s32.totalorder %s35, 0
      %p253 = por %p251, %p252
      %p254 = scmp.ne.s32.totalorder %s242, %s243
      %p255 = scmp.eq.s32.totalorder %s36, 1
      %p256 = por %p254, %p255
      %p258 = scmp.ne.s32.totalorder %s243, %s257
      %p259 = scmp.eq.s32.totalorder %s36, 0
      %p260 = por %p258, %p259
      %s262 = sadd.s32 %s261, 1
      %p265 = scmp.eq.s32.totalorder %s30, 1
      %p266 = scmp.ne.s32.totalorder %s261, %s263
      %p267 = scmp.eq.s32.totalorder %s30, 0
      %p268 = por %p266, %p267
      %p269 = scmp.ne.s32.totalorder %s261, %s263
      %p270 = scmp.eq.s32.totalorder %s35, 1
      %p271 = por %p269, %p270
      %p272 = scmp.ne.s32.totalorder %s263, %s264
      %p273 = scmp.eq.s32.totalorder %s35, 0
      %p274 = por %p272, %p273
      %p275 = scmp.ne.s32.totalorder %s263, %s264
      %p276 = scmp.eq.s32.totalorder %s36, 1
      %p277 = por %p275, %p276
      %p279 = scmp.ne.s32.totalorder %s264, %s278
      %p280 = scmp.eq.s32.totalorder %s36, 0
      %p281 = por %p279, %p280
      %s283 = sadd.s32 %s282, 1
      %p286 = scmp.eq.s32.totalorder %s30, 1
      %p287 = scmp.ne.s32.totalorder %s282, %s284
      %p288 = scmp.eq.s32.totalorder %s30, 0
      %p289 = por %p287, %p288
      %p290 = scmp.ne.s32.totalorder %s282, %s284
      %p291 = scmp.eq.s32.totalorder %s35, 1
      %p292 = por %p290, %p291
      %p293 = scmp.ne.s32.totalorder %s284, %s285
      %p294 = scmp.eq.s32.totalorder %s35, 0
      %p295 = por %p293, %p294
      %p296 = scmp.ne.s32.totalorder %s284, %s285
      %p297 = scmp.eq.s32.totalorder %s36, 1
      %p298 = por %p296, %p297
      %p300 = scmp.ne.s32.totalorder %s285, %s299
      %p301 = scmp.eq.s32.totalorder %s36, 0
      %p302 = por %p300, %p301
      %s304 = sadd.s32 %s303, 1
      %p307 = scmp.eq.s32.totalorder %s30, 1
      %p308 = scmp.ne.s32.totalorder %s303, %s305
      %p309 = scmp.eq.s32.totalorder %s30, 0
      %p310 = por %p308, %p309
      %p311 = scmp.ne.s32.totalorder %s303, %s305
      %p312 = scmp.eq.s32.totalorder %s35, 1
      %p313 = por %p311, %p312
      %p314 = scmp.ne.s32.totalorder %s305, %s306
      %p315 = scmp.eq.s32.totalorder %s35, 0
      %p316 = por %p314, %p315
      %p317 = scmp.ne.s32.totalorder %s305, %s306
      %p318 = scmp.eq.s32.totalorder %s36, 1
      %p319 = por %p317, %p318
      %p321 = scmp.ne.s32.totalorder %s306, %s320
      %p322 = scmp.eq.s32.totalorder %s36, 0
      %p323 = por %p321, %p322
      %s324 = ssub.s32 %s37, %s49
      %s325 = ssub.s32 %s38, %s45
      %s326 = sor.u32 %s324, %s325
      %p327 = scmp.eq.s32.totalorder %s326, 0
      %s329 = sadd.s32 %s328, 1
      %s330 = scalar_select %p327, %s328, %s329
      %p333 = pneg %p327
      %p334 = scmp.eq.s32.totalorder %s30, 1
      %p335 = por %p333, %p334
      %p336 = scmp.ne.s32.totalorder %s328, %s331
      %p337 = scmp.eq.s32.totalorder %s30, 0
      %p338 = por %p336, %p337
      %p339 = scmp.ne.s32.totalorder %s328, %s331
      %p340 = scmp.eq.s32.totalorder %s35, 1
      %p341 = por %p339, %p340
      %p342 = scmp.ne.s32.totalorder %s331, %s332
      %p343 = scmp.eq.s32.totalorder %s35, 0
      %p344 = por %p342, %p343
      %p345 = scmp.ne.s32.totalorder %s331, %s332
      %p346 = scmp.eq.s32.totalorder %s36, 1
      %p347 = por %p345, %p346
      %p349 = scmp.ne.s32.totalorder %s332, %s348
      %p350 = scmp.eq.s32.totalorder %s36, 0
      %p351 = por %p349, %p350
      %p352 = scmp.le.s32.totalorder 1, %s30
      %p353 = scmp.lt.s32.totalorder %s30, 3
      %p354 = pnand %p352, %p353
      %p355 = pneg %p354
      // Predicated region
      $region9: #{tpu_custom_call.1} parent=5 // pred_check
        _
      $region10: #{tpu_custom_call.1} parent=5 // pred_check_branch
        %357 = sbr.rel (%p354) target = $region12
      $region11: #{tpu_custom_call.1} parent=5 // pred_region
        %s358 = ssub.s32 %s30, 1
        // Predicated region
        $region13: #{tpu_custom_call.1} parent=11 // pred_check
          %p359 = pneg %p122
        $region14: #{tpu_custom_call.1} parent=11 // pred_check_branch
          %361 = sbr.rel (%p359) target = $region16
        $region15: #{tpu_custom_call.1} parent=11 // pred_region
          %s363 = ssub.s32 64, 64
          %364 = vsyncadd [#allocation9], %s363
          %s365 = smul.addr %s39, 64
          %s366 = scalar_lea.hbm %s2, %s365
          %s368 = sshll.u32 [#allocation10], 4
          %s369 = int_to_ptr.vmem [resolvable:$true] %s368
          %371 = dma.hbm_to_vmem [thread:$0]  %s366, 64, %s369, [#allocation9]
        $region16: #{tpu_custom_call.1} parent=11 // pred_fallthru
          _
        // Predicated region
        $region17: #{tpu_custom_call.1} parent=11 // pred_check
          %p372 = pneg %p148
        $region18: #{tpu_custom_call.1} parent=11 // pred_check_branch
          %374 = sbr.rel (%p372) target = $region20
        $region19: #{tpu_custom_call.1} parent=11 // pred_region
          %s376 = ssub.s32 64, 64
          %377 = vsyncadd [#allocation12], %s376
          %s378 = smul.addr %s39, 64
          %s379 = scalar_lea.hbm %s3, %s378
          %s381 = sshll.u32 [#allocation11], 4
          %s382 = int_to_ptr.vmem [resolvable:$true] %s381
          %384 = dma.hbm_to_vmem [thread:$0]  %s379, 64, %s382, [#allocation12]
        $region20: #{tpu_custom_call.1} parent=11 // pred_fallthru
          _
        // Predicated region
        $region21: #{tpu_custom_call.1} parent=11 // pred_check
          %p385 = pneg %p169
        $region22: #{tpu_custom_call.1} parent=11 // pred_check_branch
          %387 = sbr.rel (%p385) target = $region24
        $region23: #{tpu_custom_call.1} parent=11 // pred_region
          %s389 = ssub.s32 256, 256
          %390 = vsyncadd [#allocation12], %s389
          %s391 = sshll.u32 [#allocation13], 4
          %s392 = int_to_ptr.vmem [resolvable:$true] %s391
          %397 = dma.hbm_to_vmem [thread:$0]  %s4, 256, %s392, [#allocation12], 64, 64, 4
        $region24: #{tpu_custom_call.1} parent=11 // pred_fallthru
          _
        // Predicated region
        $region25: #{tpu_custom_call.1} parent=11 // pred_check
          %p398 = pneg %p190
        $region26: #{tpu_custom_call.1} parent=11 // pred_check_branch
          %400 = sbr.rel (%p398) target = $region28
        $region27: #{tpu_custom_call.1} parent=11 // pred_region
          _
        $region28: #{tpu_custom_call.1} parent=11 // pred_fallthru
          _
        // Predicated region
        $region29: #{tpu_custom_call.1} parent=11 // pred_check
          %p401 = pneg %p211
        $region30: #{tpu_custom_call.1} parent=11 // pred_check_branch
          %403 = sbr.rel (%p401) target = $region32
        $region31: #{tpu_custom_call.1} parent=11 // pred_region
          %s405 = ssub.s32 256, 256
          %406 = vsyncadd [#allocation15], %s405
          %s407 = sshll.u32 [#allocation14], 4
          %s408 = int_to_ptr.vmem [resolvable:$true] %s407
          %413 = dma.hbm_to_vmem [thread:$0]  %s6, 256, %s408, [#allocation15], 64, 64, 4
        $region32: #{tpu_custom_call.1} parent=11 // pred_fallthru
          _
        // Predicated region
        $region33: #{tpu_custom_call.1} parent=11 // pred_check
          %p414 = pneg %p232
        $region34: #{tpu_custom_call.1} parent=11 // pred_check_branch
          %416 = sbr.rel (%p414) target = $region36
        $region35: #{tpu_custom_call.1} parent=11 // pred_region
          _
        $region36: #{tpu_custom_call.1} parent=11 // pred_fallthru
          _
        // Predicated region
        $region37: #{tpu_custom_call.1} parent=11 // pred_check
          %p417 = pneg %p253
        $region38: #{tpu_custom_call.1} parent=11 // pred_check_branch
          %419 = sbr.rel (%p417) target = $region40
        $region39: #{tpu_custom_call.1} parent=11 // pred_region
          %s421 = ssub.s32 256, 256
          %422 = vsyncadd [#allocation15], %s421
          %s423 = sshll.u32 [#allocation16], 4
          %s424 = int_to_ptr.vmem [resolvable:$true] %s423
          %429 = dma.hbm_to_vmem [thread:$0]  %s8, 256, %s424, [#allocation15], 64, 64, 4
        $region40: #{tpu_custom_call.1} parent=11 // pred_fallthru
          _
        // Predicated region
        $region41: #{tpu_custom_call.1} parent=11 // pred_check
          %p430 = pneg %p274
        $region42: #{tpu_custom_call.1} parent=11 // pred_check_branch
          %432 = sbr.rel (%p430) target = $region44
        $region43: #{tpu_custom_call.1} parent=11 // pred_region
          %s434 = ssub.s32 16, 16
          %435 = vsyncadd [#allocation18], %s434
          %s437 = sshll.u32 [#allocation17], 4
          %s438 = int_to_ptr.vmem [resolvable:$true] %s437
          %440 = dma.hbm_to_vmem [thread:$0]  %s9, 16, %s438, [#allocation18]
        $region44: #{tpu_custom_call.1} parent=11 // pred_fallthru
          _
        // Predicated region
        $region45: #{tpu_custom_call.1} parent=11 // pred_check
          %p441 = pneg %p295
        $region46: #{tpu_custom_call.1} parent=11 // pred_check_branch
          %443 = sbr.rel (%p441) target = $region48
        $region47: #{tpu_custom_call.1} parent=11 // pred_region
          _
        $region48: #{tpu_custom_call.1} parent=11 // pred_fallthru
          _
        // Predicated region
        $region49: #{tpu_custom_call.1} parent=11 // pred_check
          %p444 = pneg %p316
        $region50: #{tpu_custom_call.1} parent=11 // pred_check_branch
          %446 = sbr.rel (%p444) target = $region52
        $region51: #{tpu_custom_call.1} parent=11 // pred_region
          _
        $region52: #{tpu_custom_call.1} parent=11 // pred_fallthru
          _
      $region12: #{tpu_custom_call.1} parent=5 // pred_fallthru
        _
      %p447 = scmp.lt.s32.totalorder %s30, 2
      // Predicated region
      $region53: #{tpu_custom_call.1} parent=5 // pred_check
        %p448 = pneg %p447
      $region54: #{tpu_custom_call.1} parent=5 // pred_check_branch
        %450 = sbr.rel (%p448) target = $region56
      $region55: #{tpu_custom_call.1} parent=5 // pred_region
        // Predicated region
        $region57: #{tpu_custom_call.1} parent=55 // pred_check
          %p451 = pneg %p62
        $region58: #{tpu_custom_call.1} parent=55 // pred_check_branch
          %453 = sbr.rel (%p451) target = $region60
        $region59: #{tpu_custom_call.1} parent=55 // pred_region
          %s454 = sand.u32 %s52, 1
          %s455 = scalar_lea.sflag [#allocation6], %s454
          %s456 = sand.u32 %s52, 1
          %s457 = scalar_lea.vmem [#allocation5], %s456
          %s459 = ssub.s32 16, 16
          %460 = vsyncadd %s455, %s459
          %s461 = smul.addr %s37, 16
          %s462 = scalar_lea.hbm %s0, %s461
          %s464 = sshll.u32 %s457, 4
          %s465 = int_to_ptr.vmem [resolvable:$true] %s464
          %467 = dma.hbm_to_vmem [thread:$0]  %s462, 16, %s465, %s455
        $region60: #{tpu_custom_call.1} parent=55 // pred_fallthru
          _
        // Predicated region
        $region61: #{tpu_custom_call.1} parent=55 // pred_check
          %p468 = pneg %p90
        $region62: #{tpu_custom_call.1} parent=55 // pred_check_branch
          %470 = sbr.rel (%p468) target = $region64
        $region63: #{tpu_custom_call.1} parent=55 // pred_region
          %s471 = sand.u32 %s30, 1
          %s472 = scalar_lea.sflag [#allocation9], %s471
          %s473 = sand.u32 %s80, 1
          %s474 = smul.addr %s473, 4
          %s475 = scalar_lea.vmem [#allocation8], %s474
          %s477 = ssub.s32 64, 64
          %478 = vsyncadd %s472, %s477
          %s479 = sadd.s32 %s38, %s37
          %s480 = smul.addr %s479, 64
          %s481 = scalar_lea.hbm %s1, %s480
          %s483 = sshll.u32 %s475, 4
          %s484 = int_to_ptr.vmem [resolvable:$true] %s483
          %486 = dma.hbm_to_vmem [thread:$0]  %s481, 64, %s484, %s472
        $region64: #{tpu_custom_call.1} parent=55 // pred_fallthru
          _
      $region56: #{tpu_custom_call.1} parent=5 // pred_fallthru
        _
      %p487 = scmp.le.s32.totalorder 1, %s30
      %p488 = scmp.lt.s32.totalorder %s30, 3
      %p489 = pnand %p487, %p488
      %p490 = pneg %p489
      // Predicated region
      $region65: #{tpu_custom_call.1} parent=5 // pred_check
        _
      $region66: #{tpu_custom_call.1} parent=5 // pred_check_branch
        %492 = sbr.rel (%p489) target = $region68
      $region67: #{tpu_custom_call.1} parent=5 // pred_region
        %s493 = ssub.s32 %s30, 1
        %s494 = sand.u32 %s55, 1
        %s495 = scalar_lea.sflag [#allocation6], %s494
        %s496 = sand.u32 %s55, 1
        %s497 = scalar_lea.vmem [#allocation5], %s496
        // Predicated region
        $region69: #{tpu_custom_call.1} parent=67 // pred_check
          %p498 = pneg %p68
        $region70: #{tpu_custom_call.1} parent=67 // pred_check_branch
          %500 = sbr.rel (%p498) target = $region72
        $region71: #{tpu_custom_call.1} parent=67 // pred_region
          %501 = dma.done %s495, 16
        $region72: #{tpu_custom_call.1} parent=67 // pred_fallthru
          _
        %s502 = sand.u32 %s35, 1
        %s503 = scalar_lea.sflag [#allocation9], %s502
        %s504 = sand.u32 %s83, 1
        %s505 = smul.addr %s504, 4
        %s506 = scalar_lea.vmem [#allocation8], %s505
        // Predicated region
        $region73: #{tpu_custom_call.1} parent=67 // pred_check
          %p507 = pneg %p96
        $region74: #{tpu_custom_call.1} parent=67 // pred_check_branch
          %509 = sbr.rel (%p507) target = $region76
        $region75: #{tpu_custom_call.1} parent=67 // pred_region
          %510 = dma.done %s503, 64
        $region76: #{tpu_custom_call.1} parent=67 // pred_fallthru
          _
        // Predicated region
        $region77: #{tpu_custom_call.1} parent=67 // pred_check
          %p511 = pneg %p122
        $region78: #{tpu_custom_call.1} parent=67 // pred_check_branch
          %513 = sbr.rel (%p511) target = $region80
        $region79: #{tpu_custom_call.1} parent=67 // pred_region
          %514 = dma.done [#allocation9], 64
        $region80: #{tpu_custom_call.1} parent=67 // pred_fallthru
          _
        // Predicated region
        $region81: #{tpu_custom_call.1} parent=67 // pred_check
          %p515 = pneg %p148
        $region82: #{tpu_custom_call.1} parent=67 // pred_check_branch
          %517 = sbr.rel (%p515) target = $region84
        $region83: #{tpu_custom_call.1} parent=67 // pred_region
          %518 = dma.done [#allocation12], 64
        $region84: #{tpu_custom_call.1} parent=67 // pred_fallthru
          _
        // Predicated region
        $region85: #{tpu_custom_call.1} parent=67 // pred_check
          %p519 = pneg %p169
        $region86: #{tpu_custom_call.1} parent=67 // pred_check_branch
          %521 = sbr.rel (%p519) target = $region88
        $region87: #{tpu_custom_call.1} parent=67 // pred_region
          %522 = dma.done [#allocation12], 256
        $region88: #{tpu_custom_call.1} parent=67 // pred_fallthru
          _
        // Predicated region
        $region89: #{tpu_custom_call.1} parent=67 // pred_check
          %p523 = pneg %p211
        $region90: #{tpu_custom_call.1} parent=67 // pred_check_branch
          %525 = sbr.rel (%p523) target = $region92
        $region91: #{tpu_custom_call.1} parent=67 // pred_region
          %526 = dma.done [#allocation15], 256
        $region92: #{tpu_custom_call.1} parent=67 // pred_fallthru
          _
        // Predicated region
        $region93: #{tpu_custom_call.1} parent=67 // pred_check
          %p527 = pneg %p253
        $region94: #{tpu_custom_call.1} parent=67 // pred_check_branch
          %529 = sbr.rel (%p527) target = $region96
        $region95: #{tpu_custom_call.1} parent=67 // pred_region
          %530 = dma.done [#allocation15], 256
        $region96: #{tpu_custom_call.1} parent=67 // pred_fallthru
          _
        // Predicated region
        $region97: #{tpu_custom_call.1} parent=67 // pred_check
          %p531 = pneg %p274
        $region98: #{tpu_custom_call.1} parent=67 // pred_check_branch
          %533 = sbr.rel (%p531) target = $region100
        $region99: #{tpu_custom_call.1} parent=67 // pred_region
          %534 = dma.done [#allocation18], 16
        $region100: #{tpu_custom_call.1} parent=67 // pred_fallthru
          _
        %s535 = sand.u32 %s55, 1
        %s536 = scalar_lea.sflag [#allocation6], %s535
        %s537 = sand.u32 %s55, 1
        %s538 = scalar_lea.vmem [#allocation5], %s537
        %p539 = pneg %p68
        %p540 = pneg %p65
        %s541 = sand.u32 %s35, 1
        %s542 = scalar_lea.sflag [#allocation9], %s541
        %s543 = sand.u32 %s83, 1
        %s544 = smul.addr %s543, 4
        %s545 = scalar_lea.vmem [#allocation8], %s544
        %p546 = pneg %p96
        %p547 = pneg %p93
        %p548 = pneg %p122
        %p549 = pneg %p119
        %p550 = pneg %p148
        %p551 = pneg %p145
        %p552 = pneg %p169
        %p553 = pneg %p166
        %p554 = pneg %p190
        %p555 = pneg %p187
        %p556 = pneg %p211
        %p557 = pneg %p208
        %p558 = pneg %p232
        %p559 = pneg %p229
        %p560 = pneg %p253
        %p561 = pneg %p250
        %p562 = pneg %p274
        %p563 = pneg %p271
        %p564 = pneg %p295
        %p565 = pneg %p292
        %p566 = pneg %p316
        %p567 = pneg %p313
        %p568 = pneg %p344
        %p569 = pneg %p341
        %s570 = sand.u32 %s331, 1
        %s571 = scalar_lea.sflag [#allocation7], %s570
        %s572 = sand.u32 %s331, 1
        %s573 = smul.addr %s572, 8
        %s574 = scalar_lea.vmem [#allocation19], %s573
        %p576 = scmp.eq.s32.totalorder %s40, 0
        // Predicated region
        $region101: #{tpu_custom_call.1} parent=67 // pred_check
          %p577 = pneg %p576
        $region102: #{tpu_custom_call.1} parent=67 // pred_check_branch
          %579 = sbr.rel (%p577) target = $region104
        $region103: #{tpu_custom_call.1} parent=67 // pred_region
          %v580 = vld [vmem:[#allocation10] sm:$0xf]
          %v581 = vld [vmem:[#allocation14] sm:$0xf]
          %v582 = vld [vmem:[#allocation14 + $0x4] sm:$0xf]
          %v583 = vld [vmem:[#allocation14 + $0x8] sm:$0xf]
          %v584 = vld [vmem:[#allocation14 + $0xc] sm:$0xf]
          %v585 = vld [vmem:[%s7] sm:$0x1]
          %v587 = vlaneseq
          %v588 = vshrl.u32 %v587, 7
          %v589 = vsub.s32 0, %v588
          %v590 = vrot.slane %v585, %v589
          %v596 = vunpack.c.l.b16 %v581
          %v597 = vunpack.c.l.b16 %v582
          %v598 = vunpack.c.l.b16 %v583
          %v599 = vunpack.c.l.b16 %v584
          %v600 = vpack.c.b16 %v597, %v596
          %v601 = vpack.c.b16 %v599, %v598
          %vm604 = vcmask 261120
          %v606 = vsel %vm604, %v580, 0
          %608 = vmatprep.subr.bf16.mxu0 0
          %609 = vmatpush1.bf16.msra.mxu0 0
          %610 = vmatprep.subr.bf16.mxu0 0
          %611 = vmatpush1.bf16.msra.mxu0 0
          %612 = vmatprep.subr.bf16.mxu0 0
          %613 = vmatpush1.bf16.msra.mxu0 0
          %614 = vmatprep.subr.bf16.mxu0 0
          %615 = vmatpush1.bf16.msra.mxu0 0
          %616 = vmatprep.subr.bf16.mxu0 0
          %617 = vmatpush1.bf16.msra.mxu0 0
          %618 = vmatprep.subr.bf16.mxu0 0
          %619 = vmatpush1.bf16.msra.mxu0 0
          %620 = vmatprep.subr.bf16.mxu0 0
          %621 = vmatpush1.bf16.msra.mxu0 %v601
          %622 = vmatprep.subr.bf16.mxu0 0
          %623 = vmatpush1.bf16.msra.mxu0 %v600
          %624 = vmatprep.subr.bf16.mxu0 0
          %625 = vmatpush2.bf16.msra.mxu0 0
          %626 = vmatprep.subr.bf16.mxu0 0
          %627 = vmatpush2.bf16.msra.mxu0 0
          %628 = vmatprep.subr.bf16.mxu0 0
          %629 = vmatpush2.bf16.msra.mxu0 0
          %630 = vmatprep.subr.bf16.mxu0 0
          %631 = vmatpush2.bf16.msra.mxu0 0
          %632 = vmatprep.subr.bf16.mxu0 0
          %633 = vmatpush2.bf16.msra.mxu0 0
          %634 = vmatprep.subr.bf16.mxu0 0
          %635 = vmatpush2.bf16.msra.mxu0 0
          %636 = vmatprep.subr.bf16.mxu0 0
          %637 = vmatpush2.bf16.msra.mxu0 0
          %638 = vmatprep.subr.bf16.mxu0 0
          %639 = vmatpush2.bf16.msra.mxu0 0
          %640 = vmatprep.mubr.bf16.mxu0 0
          %641 = vmatmul.mubr.bf16.gmra.mxu0 %v606
          %v642 = vpop.f32.mrf.mxu0
          %v643 = vadd.f32 %v590, %v642
          %v644 = vpop.f32.mrf.mxu0
          %v645 = vpop.f32.mrf.mxu0
          %v646 = vpop.f32.mrf.mxu0
          %647 = vdwg.mxu0
          %v648 = vpack.c.bf16 %v643, %v643
          %vm649 = vcmask 257024
          %650 = vst.msk [vmem:[#allocation2] sm:$0xf] %vm649, %v648
          %v651 = vld [vmem:[#allocation11] sm:$0xf]
          %v652 = vld [vmem:[#allocation16] sm:$0xf]
          %v653 = vld [vmem:[#allocation16 + $0x4] sm:$0xf]
          %v654 = vld [vmem:[#allocation16 + $0x8] sm:$0xf]
          %v655 = vld [vmem:[#allocation16 + $0xc] sm:$0xf]
          %v656 = vld [vmem:[#allocation17] sm:$0x1]
          %v658 = vlaneseq
          %v659 = vshrl.u32 %v658, 7
          %v660 = vsub.s32 0, %v659
          %v661 = vrot.slane %v656, %v660
          %v667 = vunpack.c.l.b16 %v652
          %v668 = vunpack.c.l.b16 %v653
          %v669 = vunpack.c.l.b16 %v654
          %v670 = vunpack.c.l.b16 %v655
          %v671 = vpack.c.b16 %v668, %v667
          %v672 = vpack.c.b16 %v670, %v669
          %v676 = vsel %vm604, %v651, 0
          %678 = vmatprep.subr.bf16.mxu0 0
          %679 = vmatpush1.bf16.msra.mxu0 0
          %680 = vmatprep.subr.bf16.mxu0 0
          %681 = vmatpush1.bf16.msra.mxu0 0
          %682 = vmatprep.subr.bf16.mxu0 0
          %683 = vmatpush1.bf16.msra.mxu0 0
          %684 = vmatprep.subr.bf16.mxu0 0
          %685 = vmatpush1.bf16.msra.mxu0 0
          %686 = vmatprep.subr.bf16.mxu0 0
          %687 = vmatpush1.bf16.msra.mxu0 0
          %688 = vmatprep.subr.bf16.mxu0 0
          %689 = vmatpush1.bf16.msra.mxu0 0
          %690 = vmatprep.subr.bf16.mxu0 0
          %691 = vmatpush1.bf16.msra.mxu0 %v672
          %692 = vmatprep.subr.bf16.mxu0 0
          %693 = vmatpush1.bf16.msra.mxu0 %v671
          %694 = vmatprep.subr.bf16.mxu0 0
          %695 = vmatpush2.bf16.msra.mxu0 0
          %696 = vmatprep.subr.bf16.mxu0 0
          %697 = vmatpush2.bf16.msra.mxu0 0
          %698 = vmatprep.subr.bf16.mxu0 0
          %699 = vmatpush2.bf16.msra.mxu0 0
          %700 = vmatprep.subr.bf16.mxu0 0
          %701 = vmatpush2.bf16.msra.mxu0 0
          %702 = vmatprep.subr.bf16.mxu0 0
          %703 = vmatpush2.bf16.msra.mxu0 0
          %704 = vmatprep.subr.bf16.mxu0 0
          %705 = vmatpush2.bf16.msra.mxu0 0
          %706 = vmatprep.subr.bf16.mxu0 0
          %707 = vmatpush2.bf16.msra.mxu0 0
          %708 = vmatprep.subr.bf16.mxu0 0
          %709 = vmatpush2.bf16.msra.mxu0 0
          %710 = vmatprep.mubr.bf16.mxu0 0
          %711 = vmatmul.mubr.bf16.gmra.mxu0 %v676
          %v712 = vpop.f32.mrf.mxu0
          %v713 = vadd.f32 %v661, %v712
          %v714 = vpop.f32.mrf.mxu0
          %v715 = vpop.f32.mrf.mxu0
          %v716 = vpop.f32.mrf.mxu0
          %717 = vdwg.mxu0
          %v718 = vpack.c.bf16 %v713, %v713
          %719 = vst.msk [vmem:[#allocation3] sm:$0xf] %vm649, %v718
        $region104: #{tpu_custom_call.1} parent=67 // pred_fallthru
          _
        %v720 = vld [vmem:[%s506] sm:$0xf]
        %v721 = vld [vmem:[#allocation13] sm:$0xf]
        %v722 = vld [vmem:[#allocation13 + $0x4] sm:$0xf]
        %v723 = vld [vmem:[#allocation13 + $0x8] sm:$0xf]
        %v724 = vld [vmem:[#allocation13 + $0xc] sm:$0xf]
        %v725 = vld [vmem:[%s5] sm:$0x1]
        %v727 = vlaneseq
        %v728 = vshrl.u32 %v727, 7
        %v729 = vsub.s32 0, %v728
        %v730 = vrot.slane %v725, %v729
        %v736 = vunpack.c.l.b16 %v721
        %v737 = vunpack.c.l.b16 %v722
        %v738 = vunpack.c.l.b16 %v723
        %v739 = vunpack.c.l.b16 %v724
        %v740 = vpack.c.b16 %v737, %v736
        %v741 = vpack.c.b16 %v739, %v738
        %vm744 = vcmask 261120
        %v746 = vsel %vm744, %v720, 0
        %748 = vmatprep.subr.bf16.mxu0 0
        %749 = vmatpush1.bf16.msra.mxu0 0
        %750 = vmatprep.subr.bf16.mxu0 0
        %751 = vmatpush1.bf16.msra.mxu0 0
        %752 = vmatprep.subr.bf16.mxu0 0
        %753 = vmatpush1.bf16.msra.mxu0 0
        %754 = vmatprep.subr.bf16.mxu0 0
        %755 = vmatpush1.bf16.msra.mxu0 0
        %756 = vmatprep.subr.bf16.mxu0 0
        %757 = vmatpush1.bf16.msra.mxu0 0
        %758 = vmatprep.subr.bf16.mxu0 0
        %759 = vmatpush1.bf16.msra.mxu0 0
        %760 = vmatprep.subr.bf16.mxu0 0
        %761 = vmatpush1.bf16.msra.mxu0 %v741
        %762 = vmatprep.subr.bf16.mxu0 0
        %763 = vmatpush1.bf16.msra.mxu0 %v740
        %764 = vmatprep.subr.bf16.mxu0 0
        %765 = vmatpush2.bf16.msra.mxu0 0
        %766 = vmatprep.subr.bf16.mxu0 0
        %767 = vmatpush2.bf16.msra.mxu0 0
        %768 = vmatprep.subr.bf16.mxu0 0
        %769 = vmatpush2.bf16.msra.mxu0 0
        %770 = vmatprep.subr.bf16.mxu0 0
        %771 = vmatpush2.bf16.msra.mxu0 0
        %772 = vmatprep.subr.bf16.mxu0 0
        %773 = vmatpush2.bf16.msra.mxu0 0
        %774 = vmatprep.subr.bf16.mxu0 0
        %775 = vmatpush2.bf16.msra.mxu0 0
        %776 = vmatprep.subr.bf16.mxu0 0
        %777 = vmatpush2.bf16.msra.mxu0 0
        %778 = vmatprep.subr.bf16.mxu0 0
        %779 = vmatpush2.bf16.msra.mxu0 0
        %780 = vmatprep.mubr.bf16.mxu0 0
        %781 = vmatmul.mubr.bf16.gmra.mxu0 %v746
        %v782 = vpop.f32.mrf.mxu0
        %v783 = vadd.f32 %v730, %v782
        %v784 = vpop.f32.mrf.mxu0
        %v785 = vpop.f32.mrf.mxu0
        %v786 = vpop.f32.mrf.mxu0
        %787 = vdwg.mxu0
        %v788 = vmul.f32 %v783, 0.35355338
        %v789 = vpack.c.bf16 %v788, %v788
        %v790 = vld [vmem:[#allocation2] sm:$0xf]
        %v791 = vld [vmem:[#allocation3] sm:$0xf]
        %v792 = vld [vmem:[%s497] sm:$0x1]
        %v794 = vlaneseq
        %v795 = vshrl.u32 %v794, 7
        %v796 = vsub.s32 0, %v795
        %v797 = vrot.slane %v792, %v796
        %vm799 = vcmask 64512
        %v801 = vsel %vm799, %v789, 0
        %v804 = vsel %vm799, %v790, 0
        %806 = vmatprep.subr.bf16.mxu0 0
        %807 = vmatpush1.bf16.xpose.msra.mxu0 0
        %808 = vmatprep.subr.bf16.mxu0 0
        %809 = vmatpush1.bf16.xpose.msra.mxu0 0
        %810 = vmatprep.subr.bf16.mxu0 0
        %811 = vmatpush1.bf16.xpose.msra.mxu0 0
        %812 = vmatprep.subr.bf16.mxu0 0
        %813 = vmatpush1.bf16.xpose.msra.mxu0 0
        %814 = vmatprep.subr.bf16.mxu0 0
        %815 = vmatpush1.bf16.xpose.msra.mxu0 0
        %816 = vmatprep.subr.bf16.mxu0 0
        %817 = vmatpush1.bf16.xpose.msra.mxu0 0
        %818 = vmatprep.subr.bf16.mxu0 0
        %819 = vmatpush1.bf16.xpose.msra.mxu0 0
        %820 = vmatprep.subr.bf16.mxu0 0
        %821 = vmatpush1.bf16.xpose.msra.mxu0 %v804
        %822 = vmatprep.subr.bf16.mxu0 0
        %823 = vmatpush2.bf16.xpose.msra.mxu0 0
        %824 = vmatprep.subr.bf16.mxu0 0
        %825 = vmatpush2.bf16.xpose.msra.mxu0 0
        %826 = vmatprep.subr.bf16.mxu0 0
        %827 = vmatpush2.bf16.xpose.msra.mxu0 0
        %828 = vmatprep.subr.bf16.mxu0 0
        %829 = vmatpush2.bf16.xpose.msra.mxu0 0
        %830 = vmatprep.subr.bf16.mxu0 0
        %831 = vmatpush2.bf16.xpose.msra.mxu0 0
        %832 = vmatprep.subr.bf16.mxu0 0
        %833 = vmatpush2.bf16.xpose.msra.mxu0 0
        %834 = vmatprep.subr.bf16.mxu0 0
        %835 = vmatpush2.bf16.xpose.msra.mxu0 0
        %836 = vmatprep.subr.bf16.mxu0 0
        %837 = vmatpush2.bf16.xpose.msra.mxu0 0
        %838 = vmatprep.mubr.bf16.mxu0 0
        %839 = vmatmul.mubr.bf16.gmra.mxu0 %v801
        %v840 = vpop.f32.mrf.mxu0
        %v841 = vadd.f32 %v797, %v840
        %v842 = vpop.f32.mrf.mxu0
        %v843 = vpop.f32.mrf.mxu0
        %v844 = vpop.f32.mrf.mxu0
        %845 = vdwg.mxu0
        %v846 = vsel %vm799, %v841, -inf
        %847 = vmax.xlane.f32.xlu0 %v846
        %v848 = vpop.xlane.xlu0 %847
        %v849 = vsub.f32 %v841, %v848
        %v850 = vmul.f32 %v849, 1.442695
        %v851 = vpow.pop %v850
        %v852 = vsel %vm799, %v851, 0.0
        %853 = vadd.xlane.f32.xlu0 %v852
        %v854 = vpop.xlane.xlu0 %853
        %v855 = vpack.c.bf16 %v851, %v851
        %v857 = vsel %vm799, %v855, 0
        %vm859 = vcmask 1043456
        %v861 = vsel %vm859, %v791, 0
        %863 = vmatprep.subr.bf16.mxu0 0
        %864 = vmatpush1.bf16.msra.mxu0 0
        %865 = vmatprep.subr.bf16.mxu0 0
        %866 = vmatpush1.bf16.msra.mxu0 0
        %867 = vmatprep.subr.bf16.mxu0 0
        %868 = vmatpush1.bf16.msra.mxu0 0
        %869 = vmatprep.subr.bf16.mxu0 0
        %870 = vmatpush1.bf16.msra.mxu0 0
        %871 = vmatprep.subr.bf16.mxu0 0
        %872 = vmatpush1.bf16.msra.mxu0 0
        %873 = vmatprep.subr.bf16.mxu0 0
        %874 = vmatpush1.bf16.msra.mxu0 0
        %875 = vmatprep.subr.bf16.mxu0 0
        %876 = vmatpush1.bf16.msra.mxu0 0
        %877 = vmatprep.subr.bf16.mxu0 0
        %878 = vmatpush1.bf16.msra.mxu0 %v861
        %879 = vmatprep.subr.bf16.mxu0 0
        %880 = vmatpush2.bf16.msra.mxu0 0
        %881 = vmatprep.subr.bf16.mxu0 0
        %882 = vmatpush2.bf16.msra.mxu0 0
        %883 = vmatprep.subr.bf16.mxu0 0
        %884 = vmatpush2.bf16.msra.mxu0 0
        %885 = vmatprep.subr.bf16.mxu0 0
        %886 = vmatpush2.bf16.msra.mxu0 0
        %887 = vmatprep.subr.bf16.mxu0 0
        %888 = vmatpush2.bf16.msra.mxu0 0
        %889 = vmatprep.subr.bf16.mxu0 0
        %890 = vmatpush2.bf16.msra.mxu0 0
        %891 = vmatprep.subr.bf16.mxu0 0
        %892 = vmatpush2.bf16.msra.mxu0 0
        %893 = vmatprep.subr.bf16.mxu0 0
        %894 = vmatpush2.bf16.msra.mxu0 0
        %895 = vmatprep.mubr.bf16.mxu0 0
        %896 = vmatmul.mubr.bf16.gmra.mxu0 %v857
        %v897 = vpop.f32.mrf.mxu0
        %v898 = vadd.f32 0.0, %v897
        %v899 = vpop.f32.mrf.mxu0
        %v900 = vpop.f32.mrf.mxu0
        %v901 = vpop.f32.mrf.mxu0
        %902 = vdwg.mxu0
        %v903 = vrcp.pop %v854
        %v904 = vmul.f32 %v898, %v903
        %v905 = vpack.c.bf16 %v904, %v904
        %vm906 = vcmask 60416
        %907 = vst.msk [vmem:[#allocation4] sm:$0xf] %vm906, %v905
        %909 = vrot.lane.b32.xlu0 %v789, 120
        %v910 = vpop.permute.xlu0 %909
        %v912 = vunpack.c.l.b16 %v790
        %v913 = vpack.c.b16 %v912, %v912
        %914 = vrot.lane.b32.xlu0 %v913, 120
        %v915 = vpop.permute.xlu0 %914
        %v917 = vsel %vm799, %v910, 0
        %v920 = vsel %vm799, %v915, 0
        %922 = vmatprep.subr.bf16.mxu0 0
        %923 = vmatpush1.bf16.xpose.msra.mxu0 0
        %924 = vmatprep.subr.bf16.mxu0 0
        %925 = vmatpush1.bf16.xpose.msra.mxu0 0
        %926 = vmatprep.subr.bf16.mxu0 0
        %927 = vmatpush1.bf16.xpose.msra.mxu0 0
        %928 = vmatprep.subr.bf16.mxu0 0
        %929 = vmatpush1.bf16.xpose.msra.mxu0 0
        %930 = vmatprep.subr.bf16.mxu0 0
        %931 = vmatpush1.bf16.xpose.msra.mxu0 0
        %932 = vmatprep.subr.bf16.mxu0 0
        %933 = vmatpush1.bf16.xpose.msra.mxu0 0
        %934 = vmatprep.subr.bf16.mxu0 0
        %935 = vmatpush1.bf16.xpose.msra.mxu0 0
        %936 = vmatprep.subr.bf16.mxu0 0
        %937 = vmatpush1.bf16.xpose.msra.mxu0 %v920
        %938 = vmatprep.subr.bf16.mxu0 0
        %939 = vmatpush2.bf16.xpose.msra.mxu0 0
        %940 = vmatprep.subr.bf16.mxu0 0
        %941 = vmatpush2.bf16.xpose.msra.mxu0 0
        %942 = vmatprep.subr.bf16.mxu0 0
        %943 = vmatpush2.bf16.xpose.msra.mxu0 0
        %944 = vmatprep.subr.bf16.mxu0 0
        %945 = vmatpush2.bf16.xpose.msra.mxu0 0
        %946 = vmatprep.subr.bf16.mxu0 0
        %947 = vmatpush2.bf16.xpose.msra.mxu0 0
        %948 = vmatprep.subr.bf16.mxu0 0
        %949 = vmatpush2.bf16.xpose.msra.mxu0 0
        %950 = vmatprep.subr.bf16.mxu0 0
        %951 = vmatpush2.bf16.xpose.msra.mxu0 0
        %952 = vmatprep.subr.bf16.mxu0 0
        %953 = vmatpush2.bf16.xpose.msra.mxu0 0
        %954 = vmatprep.mubr.bf16.mxu0 0
        %955 = vmatmul.mubr.bf16.gmra.mxu0 %v917
        %v956 = vpop.f32.mrf.mxu0
        %v957 = vadd.f32 %v797, %v956
        %v958 = vpop.f32.mrf.mxu0
        %v959 = vpop.f32.mrf.mxu0
        %v960 = vpop.f32.mrf.mxu0
        %961 = vdwg.mxu0
        %v962 = vsel %vm799, %v957, -inf
        %963 = vmax.xlane.f32.xlu0 %v962
        %v964 = vpop.xlane.xlu0 %963
        %v965 = vsub.f32 %v957, %v964
        %v966 = vmul.f32 %v965, 1.442695
        %v967 = vpow.pop %v966
        %v968 = vsel %vm799, %v967, 0.0
        %969 = vadd.xlane.f32.xlu0 %v968
        %v970 = vpop.xlane.xlu0 %969
        %v971 = vpack.c.bf16 %v967, %v967
        %v973 = vunpack.c.l.b16 %v791
        %v974 = vpack.c.b16 %v973, %v973
        %975 = vrot.lane.b32.xlu0 %v974, 120
        %v976 = vpop.permute.xlu0 %975
        %v978 = vsel %vm799, %v971, 0
        %v981 = vsel %vm859, %v976, 0
        %983 = vmatprep.subr.bf16.mxu0 0
        %984 = vmatpush1.bf16.msra.mxu0 0
        %985 = vmatprep.subr.bf16.mxu0 0
        %986 = vmatpush1.bf16.msra.mxu0 0
        %987 = vmatprep.subr.bf16.mxu0 0
        %988 = vmatpush1.bf16.msra.mxu0 0
        %989 = vmatprep.subr.bf16.mxu0 0
        %990 = vmatpush1.bf16.msra.mxu0 0
        %991 = vmatprep.subr.bf16.mxu0 0
        %992 = vmatpush1.bf16.msra.mxu0 0
        %993 = vmatprep.subr.bf16.mxu0 0
        %994 = vmatpush1.bf16.msra.mxu0 0
        %995 = vmatprep.subr.bf16.mxu0 0
        %996 = vmatpush1.bf16.msra.mxu0 0
        %997 = vmatprep.subr.bf16.mxu0 0
        %998 = vmatpush1.bf16.msra.mxu0 %v981
        %999 = vmatprep.subr.bf16.mxu0 0
        %1000 = vmatpush2.bf16.msra.mxu0 0
        %1001 = vmatprep.subr.bf16.mxu0 0
        %1002 = vmatpush2.bf16.msra.mxu0 0
        %1003 = vmatprep.subr.bf16.mxu0 0
        %1004 = vmatpush2.bf16.msra.mxu0 0
        %1005 = vmatprep.subr.bf16.mxu0 0
        %1006 = vmatpush2.bf16.msra.mxu0 0
        %1007 = vmatprep.subr.bf16.mxu0 0
        %1008 = vmatpush2.bf16.msra.mxu0 0
        %1009 = vmatprep.subr.bf16.mxu0 0
        %1010 = vmatpush2.bf16.msra.mxu0 0
        %1011 = vmatprep.subr.bf16.mxu0 0
        %1012 = vmatpush2.bf16.msra.mxu0 0
        %1013 = vmatprep.subr.bf16.mxu0 0
        %1014 = vmatpush2.bf16.msra.mxu0 0
        %1015 = vmatprep.mubr.bf16.mxu0 0
        %1016 = vmatmul.mubr.bf16.gmra.mxu0 %v978
        %v1017 = vpop.f32.mrf.mxu0
        %v1018 = vadd.f32 0.0, %v1017
        %v1019 = vpop.f32.mrf.mxu0
        %v1020 = vpop.f32.mrf.mxu0
        %v1021 = vpop.f32.mrf.mxu0
        %1022 = vdwg.mxu0
        %v1023 = vrcp.pop %v970
        %v1024 = vmul.f32 %v1018, %v1023
        %v1025 = vpack.c.bf16 %v1024, %v1024
        %v1027 = vunpack.c.l.b16 %v1025
        %v1028 = vpack.c.b16 %v1027, %v1027
        %1029 = vrot.lane.b32.xlu0 %v1028, 8
        %v1030 = vpop.permute.xlu0 %1029
        %vm1032 = vcmask 126016
        %1033 = vst.msk [vmem:[#allocation4] sm:$0xf] %vm1032, %v1030
        %1034 = vrot.lane.b32.xlu0 %v789, 112
        %v1035 = vpop.permute.xlu0 %1034
        %1036 = vrot.lane.b32.xlu0 %v913, 112
        %v1037 = vpop.permute.xlu0 %1036
        %v1039 = vsel %vm799, %v1035, 0
        %v1042 = vsel %vm799, %v1037, 0
        %1044 = vmatprep.subr.bf16.mxu0 0
        %1045 = vmatpush1.bf16.xpose.msra.mxu0 0
        %1046 = vmatprep.subr.bf16.mxu0 0
        %1047 = vmatpush1.bf16.xpose.msra.mxu0 0
        %1048 = vmatprep.subr.bf16.mxu0 0
        %1049 = vmatpush1.bf16.xpose.msra.mxu0 0
        %1050 = vmatprep.subr.bf16.mxu0 0
        %1051 = vmatpush1.bf16.xpose.msra.mxu0 0
        %1052 = vmatprep.subr.bf16.mxu0 0
        %1053 = vmatpush1.bf16.xpose.msra.mxu0 0
        %1054 = vmatprep.subr.bf16.mxu0 0
        %1055 = vmatpush1.bf16.xpose.msra.mxu0 0
        %1056 = vmatprep.subr.bf16.mxu0 0
        %1057 = vmatpush1.bf16.xpose.msra.mxu0 0
        %1058 = vmatprep.subr.bf16.mxu0 0
        %1059 = vmatpush1.bf16.xpose.msra.mxu0 %v1042
        %1060 = vmatprep.subr.bf16.mxu0 0
        %1061 = vmatpush2.bf16.xpose.msra.mxu0 0
        %1062 = vmatprep.subr.bf16.mxu0 0
        %1063 = vmatpush2.bf16.xpose.msra.mxu0 0
        %1064 = vmatprep.subr.bf16.mxu0 0
        %1065 = vmatpush2.bf16.xpose.msra.mxu0 0
        %1066 = vmatprep.subr.bf16.mxu0 0
        %1067 = vmatpush2.bf16.xpose.msra.mxu0 0
        %1068 = vmatprep.subr.bf16.mxu0 0
        %1069 = vmatpush2.bf16.xpose.msra.mxu0 0
        %1070 = vmatprep.subr.bf16.mxu0 0
        %1071 = vmatpush2.bf16.xpose.msra.mxu0 0
        %1072 = vmatprep.subr.bf16.mxu0 0
        %1073 = vmatpush2.bf16.xpose.msra.mxu0 0
        %1074 = vmatprep.subr.bf16.mxu0 0
        %1075 = vmatpush2.bf16.xpose.msra.mxu0 0
        %1076 = vmatprep.mubr.bf16.mxu0 0
        %1077 = vmatmul.mubr.bf16.gmra.mxu0 %v1039
        %v1078 = vpop.f32.mrf.mxu0
        %v1079 = vadd.f32 %v797, %v1078
        %v1080 = vpop.f32.mrf.mxu0
        %v1081 = vpop.f32.mrf.mxu0
        %v1082 = vpop.f32.mrf.mxu0
        %1083 = vdwg.mxu0
        %v1084 = vsel %vm799, %v1079, -inf
        %1085 = vmax.xlane.f32.xlu0 %v1084
        %v1086 = vpop.xlane.xlu0 %1085
        %v1087 = vsub.f32 %v1079, %v1086
        %v1088 = vmul.f32 %v1087, 1.442695
        %v1089 = vpow.pop %v1088
        %v1090 = vsel %vm799, %v1089, 0.0
        %1091 = vadd.xlane.f32.xlu0 %v1090
        %v1092 = vpop.xlane.xlu0 %1091
        %v1093 = vpack.c.bf16 %v1089, %v1089
        %1094 = vrot.lane.b32.xlu0 %v974, 112
        %v1095 = vpop.permute.xlu0 %1094
        %v1097 = vsel %vm799, %v1093, 0
        %v1100 = vsel %vm859, %v1095, 0
        %1102 = vmatprep.subr.bf16.mxu0 0
        %1103 = vmatpush1.bf16.msra.mxu0 0
        %1104 = vmatprep.subr.bf16.mxu0 0
        %1105 = vmatpush1.bf16.msra.mxu0 0
        %1106 = vmatprep.subr.bf16.mxu0 0
        %1107 = vmatpush1.bf16.msra.mxu0 0
        %1108 = vmatprep.subr.bf16.mxu0 0
        %1109 = vmatpush1.bf16.msra.mxu0 0
        %1110 = vmatprep.subr.bf16.mxu0 0
        %1111 = vmatpush1.bf16.msra.mxu0 0
        %1112 = vmatprep.subr.bf16.mxu0 0
        %1113 = vmatpush1.bf16.msra.mxu0 0
        %1114 = vmatprep.subr.bf16.mxu0 0
        %1115 = vmatpush1.bf16.msra.mxu0 0
        %1116 = vmatprep.subr.bf16.mxu0 0
        %1117 = vmatpush1.bf16.msra.mxu0 %v1100
        %1118 = vmatprep.subr.bf16.mxu0 0
        %1119 = vmatpush2.bf16.msra.mxu0 0
        %1120 = vmatprep.subr.bf16.mxu0 0
        %1121 = vmatpush2.bf16.msra.mxu0 0
        %1122 = vmatprep.subr.bf16.mxu0 0
        %1123 = vmatpush2.bf16.msra.mxu0 0
        %1124 = vmatprep.subr.bf16.mxu0 0
        %1125 = vmatpush2.bf16.msra.mxu0 0
        %1126 = vmatprep.subr.bf16.mxu0 0
        %1127 = vmatpush2.bf16.msra.mxu0 0
        %1128 = vmatprep.subr.bf16.mxu0 0
        %1129 = vmatpush2.bf16.msra.mxu0 0
        %1130 = vmatprep.subr.bf16.mxu0 0
        %1131 = vmatpush2.bf16.msra.mxu0 0
        %1132 = vmatprep.subr.bf16.mxu0 0
        %1133 = vmatpush2.bf16.msra.mxu0 0
        %1134 = vmatprep.mubr.bf16.mxu0 0
        %1135 = vmatmul.mubr.bf16.gmra.mxu0 %v1097
        %v1136 = vpop.f32.mrf.mxu0
        %v1137 = vadd.f32 0.0, %v1136
        %v1138 = vpop.f32.mrf.mxu0
        %v1139 = vpop.f32.mrf.mxu0
        %v1140 = vpop.f32.mrf.mxu0
        %1141 = vdwg.mxu0
        %v1142 = vrcp.pop %v1092
        %v1143 = vmul.f32 %v1137, %v1142
        %v1144 = vpack.c.bf16 %v1143, %v1143
        %v1146 = vunpack.c.l.b16 %v1144
        %v1147 = vpack.c.b16 %v1146, %v1146
        %1148 = vrot.lane.b32.xlu0 %v1147, 16
        %v1149 = vpop.permute.xlu0 %1148
        %vm1151 = vcmask 191616
        %1152 = vst.msk [vmem:[#allocation4] sm:$0xf] %vm1151, %v1149
        %1153 = vrot.lane.b32.xlu0 %v789, 104
        %v1154 = vpop.permute.xlu0 %1153
        %1155 = vrot.lane.b32.xlu0 %v913, 104
        %v1156 = vpop.permute.xlu0 %1155
        %v1158 = vsel %vm799, %v1154, 0
        %v1161 = vsel %vm799, %v1156, 0
        %1163 = vmatprep.subr.bf16.mxu0 0
        %1164 = vmatpush1.bf16.xpose.msra.mxu0 0
        %1165 = vmatprep.subr.bf16.mxu0 0
        %1166 = vmatpush1.bf16.xpose.msra.mxu0 0
        %1167 = vmatprep.subr.bf16.mxu0 0
        %1168 = vmatpush1.bf16.xpose.msra.mxu0 0
        %1169 = vmatprep.subr.bf16.mxu0 0
        %1170 = vmatpush1.bf16.xpose.msra.mxu0 0
        %1171 = vmatprep.subr.bf16.mxu0 0
        %1172 = vmatpush1.bf16.xpose.msra.mxu0 0
        %1173 = vmatprep.subr.bf16.mxu0 0
        %1174 = vmatpush1.bf16.xpose.msra.mxu0 0
        %1175 = vmatprep.subr.bf16.mxu0 0
        %1176 = vmatpush1.bf16.xpose.msra.mxu0 0
        %1177 = vmatprep.subr.bf16.mxu0 0
        %1178 = vmatpush1.bf16.xpose.msra.mxu0 %v1161
        %1179 = vmatprep.subr.bf16.mxu0 0
        %1180 = vmatpush2.bf16.xpose.msra.mxu0 0
        %1181 = vmatprep.subr.bf16.mxu0 0
        %1182 = vmatpush2.bf16.xpose.msra.mxu0 0
        %1183 = vmatprep.subr.bf16.mxu0 0
        %1184 = vmatpush2.bf16.xpose.msra.mxu0 0
        %1185 = vmatprep.subr.bf16.mxu0 0
        %1186 = vmatpush2.bf16.xpose.msra.mxu0 0
        %1187 = vmatprep.subr.bf16.mxu0 0
        %1188 = vmatpush2.bf16.xpose.msra.mxu0 0
        %1189 = vmatprep.subr.bf16.mxu0 0
        %1190 = vmatpush2.bf16.xpose.msra.mxu0 0
        %1191 = vmatprep.subr.bf16.mxu0 0
        %1192 = vmatpush2.bf16.xpose.msra.mxu0 0
        %1193 = vmatprep.subr.bf16.mxu0 0
        %1194 = vmatpush2.bf16.xpose.msra.mxu0 0
        %1195 = vmatprep.mubr.bf16.mxu0 0
        %1196 = vmatmul.mubr.bf16.gmra.mxu0 %v1158
        %v1197 = vpop.f32.mrf.mxu0
        %v1198 = vadd.f32 %v797, %v1197
        %v1199 = vpop.f32.mrf.mxu0
        %v1200 = vpop.f32.mrf.mxu0
        %v1201 = vpop.f32.mrf.mxu0
        %1202 = vdwg.mxu0
        %v1203 = vsel %vm799, %v1198, -inf
        %1204 = vmax.xlane.f32.xlu0 %v1203
        %v1205 = vpop.xlane.xlu0 %1204
        %v1206 = vsub.f32 %v1198, %v1205
        %v1207 = vmul.f32 %v1206, 1.442695
        %v1208 = vpow.pop %v1207
        %v1209 = vsel %vm799, %v1208, 0.0
        %1210 = vadd.xlane.f32.xlu0 %v1209
        %v1211 = vpop.xlane.xlu0 %1210
        %v1212 = vpack.c.bf16 %v1208, %v1208
        %1213 = vrot.lane.b32.xlu0 %v974, 104
        %v1214 = vpop.permute.xlu0 %1213
        %v1216 = vsel %vm799, %v1212, 0
        %v1219 = vsel %vm859, %v1214, 0
        %1221 = vmatprep.subr.bf16.mxu0 0
        %1222 = vmatpush1.bf16.msra.mxu0 0
        %1223 = vmatprep.subr.bf16.mxu0 0
        %1224 = vmatpush1.bf16.msra.mxu0 0
        %1225 = vmatprep.subr.bf16.mxu0 0
        %1226 = vmatpush1.bf16.msra.mxu0 0
        %1227 = vmatprep.subr.bf16.mxu0 0
        %1228 = vmatpush1.bf16.msra.mxu0 0
        %1229 = vmatprep.subr.bf16.mxu0 0
        %1230 = vmatpush1.bf16.msra.mxu0 0
        %1231 = vmatprep.subr.bf16.mxu0 0
        %1232 = vmatpush1.bf16.msra.mxu0 0
        %1233 = vmatprep.subr.bf16.mxu0 0
        %1234 = vmatpush1.bf16.msra.mxu0 0
        %1235 = vmatprep.subr.bf16.mxu0 0
        %1236 = vmatpush1.bf16.msra.mxu0 %v1219
        %1237 = vmatprep.subr.bf16.mxu0 0
        %1238 = vmatpush2.bf16.msra.mxu0 0
        %1239 = vmatprep.subr.bf16.mxu0 0
        %1240 = vmatpush2.bf16.msra.mxu0 0
        %1241 = vmatprep.subr.bf16.mxu0 0
        %1242 = vmatpush2.bf16.msra.mxu0 0
        %1243 = vmatprep.subr.bf16.mxu0 0
        %1244 = vmatpush2.bf16.msra.mxu0 0
        %1245 = vmatprep.subr.bf16.mxu0 0
        %1246 = vmatpush2.bf16.msra.mxu0 0
        %1247 = vmatprep.subr.bf16.mxu0 0
        %1248 = vmatpush2.bf16.msra.mxu0 0
        %1249 = vmatprep.subr.bf16.mxu0 0
        %1250 = vmatpush2.bf16.msra.mxu0 0
        %1251 = vmatprep.subr.bf16.mxu0 0
        %1252 = vmatpush2.bf16.msra.mxu0 0
        %1253 = vmatprep.mubr.bf16.mxu0 0
        %1254 = vmatmul.mubr.bf16.gmra.mxu0 %v1216
        %v1255 = vpop.f32.mrf.mxu0
        %v1256 = vadd.f32 0.0, %v1255
        %v1257 = vpop.f32.mrf.mxu0
        %v1258 = vpop.f32.mrf.mxu0
        %v1259 = vpop.f32.mrf.mxu0
        %1260 = vdwg.mxu0
        %v1261 = vrcp.pop %v1211
        %v1262 = vmul.f32 %v1256, %v1261
        %v1263 = vpack.c.bf16 %v1262, %v1262
        %v1265 = vunpack.c.l.b16 %v1263
        %v1266 = vpack.c.b16 %v1265, %v1265
        %1267 = vrot.lane.b32.xlu0 %v1266, 24
        %v1268 = vpop.permute.xlu0 %1267
        %vm1270 = vcmask 257216
        %1271 = vst.msk [vmem:[#allocation4] sm:$0xf] %vm1270, %v1268
        %v1272 = vld [vmem:[#allocation4] sm:$0xf]
        %v1273 = vld [vmem:[%s10] sm:$0xf]
        %v1274 = vld [vmem:[%s10 + $0x4] sm:$0xf]
        %v1275 = vld [vmem:[%s10 + $0x8] sm:$0xf]
        %v1276 = vld [vmem:[%s10 + $0xc] sm:$0xf]
        %v1277 = vld [vmem:[%s11] sm:$0x1]
        %v1279 = vlaneseq
        %v1280 = vshrl.u32 %v1279, 7
        %v1281 = vsub.s32 0, %v1280
        %v1282 = vrot.slane %v1277, %v1281
        %v1288 = vunpack.c.l.b16 %v1273
        %v1289 = vunpack.c.l.b16 %v1274
        %v1290 = vunpack.c.l.b16 %v1275
        %v1291 = vunpack.c.l.b16 %v1276
        %v1292 = vpack.c.b16 %v1289, %v1288
        %v1293 = vpack.c.b16 %v1291, %v1290
        %v1297 = vsel %vm744, %v1272, 0
        %1299 = vmatprep.subr.bf16.mxu0 0
        %1300 = vmatpush1.bf16.msra.mxu0 0
        %1301 = vmatprep.subr.bf16.mxu0 0
        %1302 = vmatpush1.bf16.msra.mxu0 0
        %1303 = vmatprep.subr.bf16.mxu0 0
        %1304 = vmatpush1.bf16.msra.mxu0 0
        %1305 = vmatprep.subr.bf16.mxu0 0
        %1306 = vmatpush1.bf16.msra.mxu0 0
        %1307 = vmatprep.subr.bf16.mxu0 0
        %1308 = vmatpush1.bf16.msra.mxu0 0
        %1309 = vmatprep.subr.bf16.mxu0 0
        %1310 = vmatpush1.bf16.msra.mxu0 0
        %1311 = vmatprep.subr.bf16.mxu0 0
        %1312 = vmatpush1.bf16.msra.mxu0 %v1293
        %1313 = vmatprep.subr.bf16.mxu0 0
        %1314 = vmatpush1.bf16.msra.mxu0 %v1292
        %1315 = vmatprep.subr.bf16.mxu0 0
        %1316 = vmatpush2.bf16.msra.mxu0 0
        %1317 = vmatprep.subr.bf16.mxu0 0
        %1318 = vmatpush2.bf16.msra.mxu0 0
        %1319 = vmatprep.subr.bf16.mxu0 0
        %1320 = vmatpush2.bf16.msra.mxu0 0
        %1321 = vmatprep.subr.bf16.mxu0 0
        %1322 = vmatpush2.bf16.msra.mxu0 0
        %1323 = vmatprep.subr.bf16.mxu0 0
        %1324 = vmatpush2.bf16.msra.mxu0 0
        %1325 = vmatprep.subr.bf16.mxu0 0
        %1326 = vmatpush2.bf16.msra.mxu0 0
        %1327 = vmatprep.subr.bf16.mxu0 0
        %1328 = vmatpush2.bf16.msra.mxu0 0
        %1329 = vmatprep.subr.bf16.mxu0 0
        %1330 = vmatpush2.bf16.msra.mxu0 0
        %1331 = vmatprep.mubr.bf16.mxu0 0
        %1332 = vmatmul.mubr.bf16.gmra.mxu0 %v1297
        %v1333 = vpop.f32.mrf.mxu0
        %v1334 = vadd.f32 %v1282, %v1333
        %v1335 = vpop.f32.mrf.mxu0
        %v1336 = vpop.f32.mrf.mxu0
        %v1337 = vpop.f32.mrf.mxu0
        %1338 = vdwg.mxu0
        %1339 = vst.msk [vmem:[%s574] sm:$0xff] %vm744, %v1334
        %s1340 = sand.u32 %s331, 1
        %s1341 = scalar_lea.sflag [#allocation7], %s1340
        %s1342 = sand.u32 %s331, 1
        %s1343 = smul.addr %s1342, 8
        %s1344 = scalar_lea.vmem [#allocation19], %s1343
        // Predicated region
        $region105: #{tpu_custom_call.1} parent=67 // pred_check
          %p1345 = pneg %p341
        $region106: #{tpu_custom_call.1} parent=67 // pred_check_branch
          %1347 = sbr.rel (%p1345) target = $region108
        $region107: #{tpu_custom_call.1} parent=67 // pred_region
          %s1349 = ssub.s32 128, 128
          %1350 = vsyncadd %s1341, %s1349
          %s1351 = sadd.s32 %s40, %s39
          %s1352 = smul.addr %s1351, 128
          %s1353 = scalar_lea.hbm %s12, %s1352
          %s1355 = sshll.u32 %s1344, 4
          %s1356 = int_to_ptr.vmem [resolvable:$true] %s1355
          %1358 = dma.vmem_to_hbm [thread:$0]  %s1356, 128, %s1353, %s1341
        $region108: #{tpu_custom_call.1} parent=67 // pred_fallthru
          _
      $region68: #{tpu_custom_call.1} parent=5 // pred_fallthru
        _
      %p1359 = scmp.le.s32.totalorder 2, %s30
      // Predicated region
      $region109: #{tpu_custom_call.1} parent=5 // pred_check
        %p1360 = pneg %p1359
      $region110: #{tpu_custom_call.1} parent=5 // pred_check_branch
        %1362 = sbr.rel (%p1360) target = $region112
      $region111: #{tpu_custom_call.1} parent=5 // pred_region
        %s1363 = ssub.s32 %s30, 2
        // Predicated region
        $region113: #{tpu_custom_call.1} parent=111 // pred_check
          %p1364 = pneg %p347
        $region114: #{tpu_custom_call.1} parent=111 // pred_check_branch
          %1366 = sbr.rel (%p1364) target = $region116
        $region115: #{tpu_custom_call.1} parent=111 // pred_region
          %s1367 = sand.u32 %s332, 1
          %s1368 = scalar_lea.sflag [#allocation7], %s1367
          %s1369 = sand.u32 %s332, 1
          %s1370 = smul.addr %s1369, 8
          %s1371 = scalar_lea.vmem [#allocation19], %s1370
          %1372 = dma.done %s1368, 128
        $region116: #{tpu_custom_call.1} parent=111 // pred_fallthru
          _
      $region112: #{tpu_custom_call.1} parent=5 // pred_fallthru
        _
    $region6: #{tpu_custom_call.1} parent=1 // loop_footer
      %s34 = sadd.s32 1, %s30
    $region7: #{tpu_custom_call.1} parent=1 // loop_footer_branch
      %29 = sbr.rel target = $region3
    $region8: #{tpu_custom_call.1} parent=1 // loop_exit
      _
    %1373 = vsyncpa [#allocation6], 1
    %s1374 = scalar_lea.sflag [#allocation6], 1
    %1375 = vsyncpa %s1374, 1
    %1376 = vsyncpa [#allocation9], 1
    %s1377 = scalar_lea.sflag [#allocation9], 1
    %1378 = vsyncpa %s1377, 1
    %1379 = vsyncpa [#allocation12], 1
    %1380 = vsyncpa [#allocation15], 1
    %1381 = vsyncpa [#allocation18], 1
    %1382 = vsyncpa [#allocation7], 1
    %s1383 = scalar_lea.sflag [#allocation7], 1
    %1384 = vsyncpa %s1383, 1

</llo_original>
